<compile_context>
chip_gen: v5e
topology: v5e:2x2
jax: 0.10.0
libtpu: 0.0.40
codegen_flags: <defaults>
</compile_context>

<pallas_src>
import math
import functools

import jax
import jax.numpy as jnp
import numpy as np
from jax import lax
from jax.experimental import pallas as pl
from jax.experimental.pallas import tpu as pltpu


def _round_up(x, m):
    return ((x + m - 1) // m) * m


# ---------------------------------------------------------------------------
# Pallas kernel: one grid step == one block of Tc LSTM time steps.
# Inputs : gates_x block (Tc, Bs, 4*Hp), W_hh^T (Hp, 4*Hp), hx (Bs, Hp), cx (Bs, Hp)
# Outputs: output block (Tc, Bs, Hp), hy (Bs, Hp), cy (Bs, Hp)
# Scratch: h, c carry (f32) persisted across the sequential time-block axis.
# ---------------------------------------------------------------------------
def _lstm_recurrent_kernel(gx_ref, whh_ref, hx_ref, cx_ref,
                           out_ref, hy_ref, cy_ref,
                           h_sc, c_sc,
                           *, hidden_pad, time_block, seq_len, seq_len_pad):
    g = pl.program_id(1)                      # time-block index (sequential)
    n_tblk = pl.num_programs(1)
    Hp = hidden_pad
    needs_mask = (seq_len_pad != seq_len)     # static Python bool

    # Initialize recurrent state from hx/cx at the first time block.
    @pl.when(g == 0)
    def _():
        h_sc[...] = hx_ref[...].astype(jnp.float32)
        c_sc[...] = cx_ref[...].astype(jnp.float32)

    # Resident recurrent weight (possibly bf16); hoisted out of the inner loop.
    whh = whh_ref[...]
    mm_dtype = whh.dtype

    def step(lt, carry):
        h, c = carry
        gx = gx_ref[lt].astype(jnp.float32)                     # (Bs, 4Hp)
        gates = gx + jnp.dot(h.astype(mm_dtype), whh,
                             preferred_element_type=jnp.float32)

        # 128-aligned gate slices (Hp is a multiple of 128).
        i_g = jax.nn.sigmoid(gates[:, 0 * Hp:1 * Hp])
        f_g = jax.nn.sigmoid(gates[:, 1 * Hp:2 * Hp])
        g_g = jnp.tanh(gates[:, 2 * Hp:3 * Hp])
        o_g = jax.nn.sigmoid(gates[:, 3 * Hp:4 * Hp])

        c_new = f_g * c + i_g * g_g
        h_new = o_g * jnp.tanh(c_new)

        # Lane-dense (Bs, Hp) store; padded time rows are sliced off outside.
        out_ref[lt] = h_new.astype(out_ref.dtype)

        if needs_mask:
            # Do not advance the carry past the real sequence length.
            step_idx = g * time_block + lt
            valid = jnp.full(h.shape, step_idx, dtype=jnp.int32) < seq_len
            h = jnp.where(valid, h_new, h)
            c = jnp.where(valid, c_new, c)
        else:
            h, c = h_new, c_new
        return h, c

    h0 = h_sc[...]
    c0 = c_sc[...]
    h_fin, c_fin = lax.fori_loop(0, time_block, step, (h0, c0),
                                 unroll=(time_block <= 8))
    h_sc[...] = h_fin
    c_sc[...] = c_fin

    # Final states written only once, on the last time block.
    @pl.when(g == n_tblk - 1)
    def _():
        hy_ref[...] = h_fin.astype(hy_ref.dtype)
        cy_ref[...] = c_fin.astype(cy_ref.dtype)


# ---------------------------------------------------------------------------
# One-time parameter preparation (transpose / per-gate padding / bias fusion).
# Call once and reuse across many forwards.
# ---------------------------------------------------------------------------
def prepare_lstm_params(w_ih, w_hh, b_ih, b_hh, *, matmul_dtype=jnp.float32):
    H4, I = w_ih.shape
    H = H4 // 4
    Hp = _round_up(H, 128)      # per-gate lane padding -> aligned gate tiles

    # (4H, I) -> (I, 4H) -> (I, 4, H) -> pad H -> (I, 4*Hp)
    wih_t = jnp.transpose(w_ih).reshape(I, 4, H)
    wih_t = jnp.pad(wih_t, ((0, 0), (0, 0), (0, Hp - H))).reshape(I, 4 * Hp)

    # (4H, H) -> (H, 4H) -> (H, 4, H) -> pad -> (Hp, 4*Hp)
    whh_t = jnp.transpose(w_hh).reshape(H, 4, H)
    whh_t = jnp.pad(whh_t, ((0, Hp - H), (0, 0), (0, Hp - H))).reshape(Hp, 4 * Hp)
    whh_t = whh_t.astype(matmul_dtype)

    bias = (b_ih + b_hh).reshape(4, H)
    bias = jnp.pad(bias, ((0, 0), (0, Hp - H))).reshape(1, 4 * Hp)

    return dict(wih_t=wih_t, whh_t=whh_t, bias=bias,
                hidden=H, hidden_pad=Hp, input_size=I)


def _pick_batch_shards(b_pad, requested):
    n = max(1, int(requested))
    while n > 1:
        if b_pad % n == 0 and (b_pad // n) % 8 == 0:
            break
        n -= 1
    return n


# ---------------------------------------------------------------------------
# Forward with pre-prepared parameters.
# ---------------------------------------------------------------------------
def cudnn_lstm_forward_prepared(x, params, hx=None, cx=None, *,
                                time_block=8, batch_shards=1):
    T, B, I = x.shape
    H = params["hidden"]
    Hp = params["hidden_pad"]
    wih_t, whh_t, bias = params["wih_t"], params["whh_t"], params["bias"]

    if hx is None:
        hx = jnp.zeros((1, B, H), x.dtype)
    if cx is None:
        cx = jnp.zeros((1, B, H), x.dtype)

    Bp = _round_up(B, 8)                       # sublane-aligned batch
    tc = max(1, min(int(time_block), T))       # time steps per grid block
    Tp = _round_up(T, tc)
    n_tblk = Tp // tc
    n_bshard = _pick_batch_shards(Bp, batch_shards)   # =2 exploits v7x megacore
    Bs = Bp // n_bshard

    # Hoisted input projection: one big matmul at full MXU occupancy.
    gx = x.reshape(T * B, I) @ wih_t + bias                    # (T*B, 4Hp) f32
    gx = gx.reshape(T, B, 4 * Hp)
    gx = jnp.pad(gx, ((0, Tp - T), (0, Bp - B), (0, 0)))       # (Tp, Bp, 4Hp)

    hx_p = jnp.pad(hx.reshape(B, H), ((0, Bp - B), (0, Hp - H)))
    cx_p = jnp.pad(cx.reshape(B, H), ((0, Bp - B), (0, Hp - H)))

    kernel = functools.partial(_lstm_recurrent_kernel,
                               hidden_pad=Hp, time_block=tc,
                               seq_len=T, seq_len_pad=Tp)

    out_p, hy_p, cy_p = pl.pallas_call(
        kernel,
        out_shape=(
            jax.ShapeDtypeStruct((Tp, Bp, Hp), x.dtype),
            jax.ShapeDtypeStruct((Bp, Hp), x.dtype),
            jax.ShapeDtypeStruct((Bp, Hp), x.dtype),
        ),
        grid_spec=pltpu.PrefetchScalarGridSpec(
            num_scalar_prefetch=0,
            grid=(n_bshard, n_tblk),
            in_specs=[
                pl.BlockSpec((tc, Bs, 4 * Hp), lambda b, g: (g, b, 0)),   # gates_x
                pl.BlockSpec((Hp, 4 * Hp), lambda b, g: (0, 0)),          # W_hh^T (resident)
                pl.BlockSpec((Bs, Hp), lambda b, g: (b, 0)),              # hx
                pl.BlockSpec((Bs, Hp), lambda b, g: (b, 0)),              # cx
            ],
            out_specs=[
                pl.BlockSpec((tc, Bs, Hp), lambda b, g: (g, b, 0)),       # output
                pl.BlockSpec((Bs, Hp), lambda b, g: (b, 0)),              # hy (resident)
                pl.BlockSpec((Bs, Hp), lambda b, g: (b, 0)),              # cy (resident)
            ],
            scratch_shapes=[
                pltpu.VMEM((Bs, Hp), jnp.float32),                        # h carry
                pltpu.VMEM((Bs, Hp), jnp.float32),                        # c carry
            ],
        ),
        compiler_params=pltpu.CompilerParams(
            dimension_semantics=("parallel", "arbitrary"),   # batch ∥, time sequential
        ),
    )(gx, whh_t, hx_p, cx_p)

    out = out_p[:T, :B, :H]
    hy = hy_p[:B, :H].reshape(1, B, H)
    cy = cy_p[:B, :H].reshape(1, B, H)
    return out, (hy, cy)


# Convenience entry point matching the module's forward signature.
def cudnn_lstm_forward(x, w_ih, w_hh, b_ih, b_hh, hx=None, cx=None, *,
                       time_block=8, batch_shards=1, matmul_dtype=jnp.float32):
    params = prepare_lstm_params(w_ih, w_hh, b_ih, b_hh, matmul_dtype=matmul_dtype)
    return cudnn_lstm_forward_prepared(x, params, hx, cx,
                                       time_block=time_block,
                                       batch_shards=batch_shards)


# ---------------------------------------------------------------------------
# Pure-JAX reference (lax.scan) for correctness checking
# ---------------------------------------------------------------------------
def lstm_reference(x, w_ih, w_hh, b_ih, b_hh):
    H = w_hh.shape[1]

    def step(carry, x_t):
        h, c = carry
        gates = x_t @ w_ih.T + h @ w_hh.T + b_ih + b_hh
        i_g = jax.nn.sigmoid(gates[:, 0 * H:1 * H])
        f_g = jax.nn.sigmoid(gates[:, 1 * H:2 * H])
        g_g = jnp.tanh(gates[:, 2 * H:3 * H])
        o_g = jax.nn.sigmoid(gates[:, 3 * H:4 * H])
        c_new = f_g * c + i_g * g_g
        h_new = o_g * jnp.tanh(c_new)
        return (h_new, c_new), h_new

    B = x.shape[1]
    h0 = jnp.zeros((B, H), x.dtype)
    c0 = jnp.zeros((B, H), x.dtype)
    (hT, cT), out = lax.scan(step, (h0, c0), x)
    return out, hT, cT


if __name__ == "__main__":
    # Small shapes consistent with the module: seq=8, batch=2, inputSize=16, hiddenSize=32.
    T, B, I, H = 8, 2, 16, 32

    key = jax.random.PRNGKey(0)
    k_x, k_wih, k_whh, k_bih, k_bhh = jax.random.split(key, 5)

    # reset_parameters(): uniform(-stdv, stdv), stdv = 1/sqrt(hiddenSize)
    stdv = 1.0 / math.sqrt(H)
    w_ih = jax.random.uniform(k_wih, (4 * H, I), jnp.float32, -stdv, stdv)
    w_hh = jax.random.uniform(k_whh, (4 * H, H), jnp.float32, -stdv, stdv)
    b_ih = jax.random.uniform(k_bih, (4 * H,), jnp.float32, -stdv, stdv)
    b_hh = jax.random.uniform(k_bhh, (4 * H,), jnp.float32, -stdv, stdv)

    x = jax.random.normal(k_x, (T, B, I), jnp.float32)

    ref_out, ref_h, ref_c = lstm_reference(x, w_ih, w_hh, b_ih, b_hh)

    # --- Config 1: f32 matmul, time blocked (Tc=4 -> carry crosses grid steps) ---
    out, (hy, cy) = cudnn_lstm_forward(x, w_ih, w_hh, b_ih, b_hh, time_block=4)
    out = jax.block_until_ready(out)
    hy = jax.block_until_ready(hy)
    cy = jax.block_until_ready(cy)

    np.testing.assert_allclose(np.asarray(out), np.asarray(ref_out), rtol=1e-5, atol=1e-5)
    np.testing.assert_allclose(np.asarray(hy[0]), np.asarray(ref_h), rtol=1e-5, atol=1e-5)
    np.testing.assert_allclose(np.asarray(cy[0]), np.asarray(ref_c), rtol=1e-5, atol=1e-5)
    assert out.shape == (T, B, H) and hy.shape == (1, B, H) and cy.shape == (1, B, H)

    # --- Config 2: bf16 recurrent-matmul operands + Tc=3 (exercises time padding) ---
    out2, (hy2, cy2) = cudnn_lstm_forward(x, w_ih, w_hh, b_ih, b_hh,
                                          time_block=3, matmul_dtype=jnp.bfloat16)
    out2 = jax.block_until_ready(out2)
    hy2 = jax.block_until_ready(hy2)
    cy2 = jax.block_until_ready(cy2)

    np.testing.assert_allclose(np.asarray(out2), np.asarray(ref_out), rtol=5e-2, atol=5e-2)
    np.testing.assert_allclose(np.asarray(hy2[0]), np.asarray(ref_h), rtol=5e-2, atol=5e-2)
    np.testing.assert_allclose(np.asarray(cy2[0]), np.asarray(ref_c), rtol=5e-2, atol=5e-2)
    assert out2.shape == (T, B, H)

    print("KERNEL_OK")
</pallas_src>

<mosaic_0001>
module attributes {stable_mosaic.version = 11 : i64} {
  func.func @_lstm_recurrent_kernel(%arg0: i32, %arg1: i32, %arg2: memref<4x8x512xf32, #tpu.memory_space<vmem>>, %arg3: memref<128x512xf32, #tpu.memory_space<vmem>>, %arg4: memref<8x128xf32, #tpu.memory_space<vmem>>, %arg5: memref<8x128xf32, #tpu.memory_space<vmem>>, %arg6: memref<4x8x128xf32, #tpu.memory_space<vmem>>, %arg7: memref<8x128xf32, #tpu.memory_space<vmem>>, %arg8: memref<8x128xf32, #tpu.memory_space<vmem>>, %arg9: memref<8x128xf32, #tpu.memory_space<vmem>>, %arg10: memref<8x128xf32, #tpu.memory_space<vmem>>) attributes {dimension_semantics = [#tpu.dimension_semantics<parallel>, #tpu.dimension_semantics<arbitrary>], iteration_bounds = array<i64: 1, 2>, scalar_prefetch = 0 : i64, scratch_operands = 2 : i64, tpu.core_type = #tpu.core_type<tc>, window_params = [{transform_indices = @transform_0, window_bounds = array<i64: 4, 8, 512>}, {pipeline_mode = #tpu.pipeline_mode<synchronous>, transform_indices = @transform_1, window_bounds = array<i64: 128, 512>}, {transform_indices = @transform_2, window_bounds = array<i64: 8, 128>}, {transform_indices = @transform_3, window_bounds = array<i64: 8, 128>}, {transform_indices = @transform_4, window_bounds = array<i64: 4, 8, 128>}, {transform_indices = @transform_5, window_bounds = array<i64: 8, 128>}, {transform_indices = @transform_6, window_bounds = array<i64: 8, 128>}]} {
    %c0_i32 = arith.constant 0 : i32
    %0 = arith.cmpi eq, %arg1, %c0_i32 : i32
    %1 = arith.extui %0 : i1 to i32
    %c0_i32_0 = arith.constant 0 : i32
    %2 = arith.cmpi ne, %1, %c0_i32_0 : i32
    scf.if %2 {
      %c0_44 = arith.constant 0 : index
      %c0_45 = arith.constant 0 : index
      %147 = vector.load %arg4[%c0_44, %c0_45] : memref<8x128xf32, #tpu.memory_space<vmem>>, vector<8x128xf32>
      %c0_46 = arith.constant 0 : index
      %c0_47 = arith.constant 0 : index
      %148 = vector.load %arg9[%c0_46, %c0_47] : memref<8x128xf32, #tpu.memory_space<vmem>>, vector<8x128xf32>
      tpu.vector_store %arg9[%c0_46, %c0_47], %147 {strides = array<i32>} : memref<8x128xf32, #tpu.memory_space<vmem>>, vector<8x128xf32>,
      %c0_48 = arith.constant 0 : index
      %c0_49 = arith.constant 0 : index
      %149 = vector.load %arg5[%c0_48, %c0_49] : memref<8x128xf32, #tpu.memory_space<vmem>>, vector<8x128xf32>
      %c0_50 = arith.constant 0 : index
      %c0_51 = arith.constant 0 : index
      %150 = vector.load %arg10[%c0_50, %c0_51] : memref<8x128xf32, #tpu.memory_space<vmem>>, vector<8x128xf32>
      tpu.vector_store %arg10[%c0_50, %c0_51], %149 {strides = array<i32>} : memref<8x128xf32, #tpu.memory_space<vmem>>, vector<8x128xf32>,
    } else {
    }
    %c0 = arith.constant 0 : index
    %c0_1 = arith.constant 0 : index
    %3 = vector.load %arg3[%c0, %c0_1] : memref<128x512xf32, #tpu.memory_space<vmem>>, vector<128x512xf32>
    %c0_2 = arith.constant 0 : index
    %c0_3 = arith.constant 0 : index
    %4 = vector.load %arg9[%c0_2, %c0_3] : memref<8x128xf32, #tpu.memory_space<vmem>>, vector<8x128xf32>
    %c0_4 = arith.constant 0 : index
    %c0_5 = arith.constant 0 : index
    %5 = vector.load %arg10[%c0_4, %c0_5] : memref<8x128xf32, #tpu.memory_space<vmem>>, vector<8x128xf32>
    %c0_i32_6 = arith.constant 0 : i32
    %6 = arith.index_cast %c0_i32_6 : i32 to index
    %c0_7 = arith.constant 0 : index
    %c0_8 = arith.constant 0 : index
    %7 = vector.load %arg2[%6, %c0_7, %c0_8] : memref<4x8x512xf32, #tpu.memory_space<vmem>>, vector<1x8x512xf32>
    %8 = vector.shape_cast %7 : vector<1x8x512xf32> to vector<8x512xf32>
    %cst = arith.constant dense<0.000000e+00> : vector<8x512xf32>
    %9 = tpu.matmul %4, %3, %cst {dimension_numbers = #tpu.dot_dimension_numbers<[1], [0], [0], [1], [0, 0, 1, 1], [], []>} : vector<8x128xf32>, vector<128x512xf32>, vector<8x512xf32> -> vector<8x512xf32>
    %10 = arith.addf %8, %9 : vector<8x512xf32>
    %11 = vector.extract_strided_slice %10 {offsets = [0, 0], sizes = [8, 128], strides = [1, 1]} : vector<8x512xf32> to vector<8x128xf32>
    %12 = arith.negf %11 : vector<8x128xf32>
    %13 = math.exp %12 : vector<8x128xf32>
    %cst_9 = arith.constant 1.000000e+00 : f32
    %14 = vector.broadcast %cst_9 : f32 to vector<8x128xf32>
    %15 = arith.addf %14, %13 : vector<8x128xf32>
    %16 = arith.divf %14, %15 : vector<8x128xf32>
    %17 = vector.extract_strided_slice %10 {offsets = [0, 128], sizes = [8, 128], strides = [1, 1]} : vector<8x512xf32> to vector<8x128xf32>
    %18 = arith.negf %17 : vector<8x128xf32>
    %19 = math.exp %18 : vector<8x128xf32>
    %cst_10 = arith.constant 1.000000e+00 : f32
    %20 = vector.broadcast %cst_10 : f32 to vector<8x128xf32>
    %21 = arith.addf %20, %19 : vector<8x128xf32>
    %22 = arith.divf %20, %21 : vector<8x128xf32>
    %23 = vector.extract_strided_slice %10 {offsets = [0, 256], sizes = [8, 128], strides = [1, 1]} : vector<8x512xf32> to vector<8x128xf32>
    %24 = math.tanh %23 : vector<8x128xf32>
    %25 = vector.extract_strided_slice %10 {offsets = [0, 384], sizes = [8, 128], strides = [1, 1]} : vector<8x512xf32> to vector<8x128xf32>
    %26 = arith.negf %25 : vector<8x128xf32>
    %27 = math.exp %26 : vector<8x128xf32>
    %cst_11 = arith.constant 1.000000e+00 : f32
    %28 = vector.broadcast %cst_11 : f32 to vector<8x128xf32>
    %29 = arith.addf %28, %27 : vector<8x128xf32>
    %30 = arith.divf %28, %29 : vector<8x128xf32>
    %31 = arith.mulf %22, %5 : vector<8x128xf32>
    %32 = arith.mulf %16, %24 : vector<8x128xf32>
    %33 = arith.addf %31, %32 : vector<8x128xf32>
    %34 = math.tanh %33 : vector<8x128xf32>
    %35 = arith.mulf %30, %34 : vector<8x128xf32>
    %36 = arith.index_cast %c0_i32_6 : i32 to index
    %c0_12 = arith.constant 0 : index
    %c0_13 = arith.constant 0 : index
    %37 = vector.load %arg6[%36, %c0_12, %c0_13] : memref<4x8x128xf32, #tpu.memory_space<vmem>>, vector<1x8x128xf32>
    %38 = vector.shape_cast %37 : vector<1x8x128xf32> to vector<8x128xf32>
    %39 = vector.shape_cast %35 : vector<8x128xf32> to vector<1x8x128xf32>
    tpu.vector_store %arg6[%36, %c0_12, %c0_13], %39 {strides = array<i32>} : memref<4x8x128xf32, #tpu.memory_space<vmem>>, vector<1x8x128xf32>,
    %c1_i32 = arith.constant 1 : i32
    %40 = arith.index_cast %c1_i32 : i32 to index
    %c0_14 = arith.constant 0 : index
    %c0_15 = arith.constant 0 : index
    %41 = vector.load %arg2[%40, %c0_14, %c0_15] : memref<4x8x512xf32, #tpu.memory_space<vmem>>, vector<1x8x512xf32>
    %42 = vector.shape_cast %41 : vector<1x8x512xf32> to vector<8x512xf32>
    %cst_16 = arith.constant dense<0.000000e+00> : vector<8x512xf32>
    %43 = tpu.matmul %35, %3, %cst_16 {dimension_numbers = #tpu.dot_dimension_numbers<[1], [0], [0], [1], [0, 0, 1, 1], [], []>} : vector<8x128xf32>, vector<128x512xf32>, vector<8x512xf32> -> vector<8x512xf32>
    %44 = arith.addf %42, %43 : vector<8x512xf32>
    %45 = vector.extract_strided_slice %44 {offsets = [0, 0], sizes = [8, 128], strides = [1, 1]} : vector<8x512xf32> to vector<8x128xf32>
    %46 = arith.negf %45 : vector<8x128xf32>
    %47 = math.exp %46 : vector<8x128xf32>
    %cst_17 = arith.constant 1.000000e+00 : f32
    %48 = vector.broadcast %cst_17 : f32 to vector<8x128xf32>
    %49 = arith.addf %48, %47 : vector<8x128xf32>
    %50 = arith.divf %48, %49 : vector<8x128xf32>
    %51 = vector.extract_strided_slice %44 {offsets = [0, 128], sizes = [8, 128], strides = [1, 1]} : vector<8x512xf32> to vector<8x128xf32>
    %52 = arith.negf %51 : vector<8x128xf32>
    %53 = math.exp %52 : vector<8x128xf32>
    %cst_18 = arith.constant 1.000000e+00 : f32
    %54 = vector.broadcast %cst_18 : f32 to vector<8x128xf32>
    %55 = arith.addf %54, %53 : vector<8x128xf32>
    %56 = arith.divf %54, %55 : vector<8x128xf32>
    %57 = vector.extract_strided_slice %44 {offsets = [0, 256], sizes = [8, 128], strides = [1, 1]} : vector<8x512xf32> to vector<8x128xf32>
    %58 = math.tanh %57 : vector<8x128xf32>
    %59 = vector.extract_strided_slice %44 {offsets = [0, 384], sizes = [8, 128], strides = [1, 1]} : vector<8x512xf32> to vector<8x128xf32>
    %60 = arith.negf %59 : vector<8x128xf32>
    %61 = math.exp %60 : vector<8x128xf32>
    %cst_19 = arith.constant 1.000000e+00 : f32
    %62 = vector.broadcast %cst_19 : f32 to vector<8x128xf32>
    %63 = arith.addf %62, %61 : vector<8x128xf32>
    %64 = arith.divf %62, %63 : vector<8x128xf32>
    %65 = arith.mulf %56, %33 : vector<8x128xf32>
    %66 = arith.mulf %50, %58 : vector<8x128xf32>
    %67 = arith.addf %65, %66 : vector<8x128xf32>
    %68 = math.tanh %67 : vector<8x128xf32>
    %69 = arith.mulf %64, %68 : vector<8x128xf32>
    %70 = arith.index_cast %c1_i32 : i32 to index
    %c0_20 = arith.constant 0 : index
    %c0_21 = arith.constant 0 : index
    %71 = vector.load %arg6[%70, %c0_20, %c0_21] : memref<4x8x128xf32, #tpu.memory_space<vmem>>, vector<1x8x128xf32>
    %72 = vector.shape_cast %71 : vector<1x8x128xf32> to vector<8x128xf32>
    %73 = vector.shape_cast %69 : vector<8x128xf32> to vector<1x8x128xf32>
    tpu.vector_store %arg6[%70, %c0_20, %c0_21], %73 {strides = array<i32>} : memref<4x8x128xf32, #tpu.memory_space<vmem>>, vector<1x8x128xf32>,
    %c2_i32 = arith.constant 2 : i32
    %74 = arith.index_cast %c2_i32 : i32 to index
    %c0_22 = arith.constant 0 : index
    %c0_23 = arith.constant 0 : index
    %75 = vector.load %arg2[%74, %c0_22, %c0_23] : memref<4x8x512xf32, #tpu.memory_space<vmem>>, vector<1x8x512xf32>
    %76 = vector.shape_cast %75 : vector<1x8x512xf32> to vector<8x512xf32>
    %cst_24 = arith.constant dense<0.000000e+00> : vector<8x512xf32>
    %77 = tpu.matmul %69, %3, %cst_24 {dimension_numbers = #tpu.dot_dimension_numbers<[1], [0], [0], [1], [0, 0, 1, 1], [], []>} : vector<8x128xf32>, vector<128x512xf32>, vector<8x512xf32> -> vector<8x512xf32>
    %78 = arith.addf %76, %77 : vector<8x512xf32>
    %79 = vector.extract_strided_slice %78 {offsets = [0, 0], sizes = [8, 128], strides = [1, 1]} : vector<8x512xf32> to vector<8x128xf32>
    %80 = arith.negf %79 : vector<8x128xf32>
    %81 = math.exp %80 : vector<8x128xf32>
    %cst_25 = arith.constant 1.000000e+00 : f32
    %82 = vector.broadcast %cst_25 : f32 to vector<8x128xf32>
    %83 = arith.addf %82, %81 : vector<8x128xf32>
    %84 = arith.divf %82, %83 : vector<8x128xf32>
    %85 = vector.extract_strided_slice %78 {offsets = [0, 128], sizes = [8, 128], strides = [1, 1]} : vector<8x512xf32> to vector<8x128xf32>
    %86 = arith.negf %85 : vector<8x128xf32>
    %87 = math.exp %86 : vector<8x128xf32>
    %cst_26 = arith.constant 1.000000e+00 : f32
    %88 = vector.broadcast %cst_26 : f32 to vector<8x128xf32>
    %89 = arith.addf %88, %87 : vector<8x128xf32>
    %90 = arith.divf %88, %89 : vector<8x128xf32>
    %91 = vector.extract_strided_slice %78 {offsets = [0, 256], sizes = [8, 128], strides = [1, 1]} : vector<8x512xf32> to vector<8x128xf32>
    %92 = math.tanh %91 : vector<8x128xf32>
    %93 = vector.extract_strided_slice %78 {offsets = [0, 384], sizes = [8, 128], strides = [1, 1]} : vector<8x512xf32> to vector<8x128xf32>
    %94 = arith.negf %93 : vector<8x128xf32>
    %95 = math.exp %94 : vector<8x128xf32>
    %cst_27 = arith.constant 1.000000e+00 : f32
    %96 = vector.broadcast %cst_27 : f32 to vector<8x128xf32>
    %97 = arith.addf %96, %95 : vector<8x128xf32>
    %98 = arith.divf %96, %97 : vector<8x128xf32>
    %99 = arith.mulf %90, %67 : vector<8x128xf32>
    %100 = arith.mulf %84, %92 : vector<8x128xf32>
    %101 = arith.addf %99, %100 : vector<8x128xf32>
    %102 = math.tanh %101 : vector<8x128xf32>
    %103 = arith.mulf %98, %102 : vector<8x128xf32>
    %104 = arith.index_cast %c2_i32 : i32 to index
    %c0_28 = arith.constant 0 : index
    %c0_29 = arith.constant 0 : index
    %105 = vector.load %arg6[%104, %c0_28, %c0_29] : memref<4x8x128xf32, #tpu.memory_space<vmem>>, vector<1x8x128xf32>
    %106 = vector.shape_cast %105 : vector<1x8x128xf32> to vector<8x128xf32>
    %107 = vector.shape_cast %103 : vector<8x128xf32> to vector<1x8x128xf32>
    tpu.vector_store %arg6[%104, %c0_28, %c0_29], %107 {strides = array<i32>} : memref<4x8x128xf32, #tpu.memory_space<vmem>>, vector<1x8x128xf32>,
    %c3_i32 = arith.constant 3 : i32
    %108 = arith.index_cast %c3_i32 : i32 to index
    %c0_30 = arith.constant 0 : index
    %c0_31 = arith.constant 0 : index
    %109 = vector.load %arg2[%108, %c0_30, %c0_31] : memref<4x8x512xf32, #tpu.memory_space<vmem>>, vector<1x8x512xf32>
    %110 = vector.shape_cast %109 : vector<1x8x512xf32> to vector<8x512xf32>
    %cst_32 = arith.constant dense<0.000000e+00> : vector<8x512xf32>
    %111 = tpu.matmul %103, %3, %cst_32 {dimension_numbers = #tpu.dot_dimension_numbers<[1], [0], [0], [1], [0, 0, 1, 1], [], []>} : vector<8x128xf32>, vector<128x512xf32>, vector<8x512xf32> -> vector<8x512xf32>
    %112 = arith.addf %110, %111 : vector<8x512xf32>
    %113 = vector.extract_strided_slice %112 {offsets = [0, 0], sizes = [8, 128], strides = [1, 1]} : vector<8x512xf32> to vector<8x128xf32>
    %114 = arith.negf %113 : vector<8x128xf32>
    %115 = math.exp %114 : vector<8x128xf32>
    %cst_33 = arith.constant 1.000000e+00 : f32
    %116 = vector.broadcast %cst_33 : f32 to vector<8x128xf32>
    %117 = arith.addf %116, %115 : vector<8x128xf32>
    %118 = arith.divf %116, %117 : vector<8x128xf32>
    %119 = vector.extract_strided_slice %112 {offsets = [0, 128], sizes = [8, 128], strides = [1, 1]} : vector<8x512xf32> to vector<8x128xf32>
    %120 = arith.negf %119 : vector<8x128xf32>
    %121 = math.exp %120 : vector<8x128xf32>
    %cst_34 = arith.constant 1.000000e+00 : f32
    %122 = vector.broadcast %cst_34 : f32 to vector<8x128xf32>
    %123 = arith.addf %122, %121 : vector<8x128xf32>
    %124 = arith.divf %122, %123 : vector<8x128xf32>
    %125 = vector.extract_strided_slice %112 {offsets = [0, 256], sizes = [8, 128], strides = [1, 1]} : vector<8x512xf32> to vector<8x128xf32>
    %126 = math.tanh %125 : vector<8x128xf32>
    %127 = vector.extract_strided_slice %112 {offsets = [0, 384], sizes = [8, 128], strides = [1, 1]} : vector<8x512xf32> to vector<8x128xf32>
    %128 = arith.negf %127 : vector<8x128xf32>
    %129 = math.exp %128 : vector<8x128xf32>
    %cst_35 = arith.constant 1.000000e+00 : f32
    %130 = vector.broadcast %cst_35 : f32 to vector<8x128xf32>
    %131 = arith.addf %130, %129 : vector<8x128xf32>
    %132 = arith.divf %130, %131 : vector<8x128xf32>
    %133 = arith.mulf %124, %101 : vector<8x128xf32>
    %134 = arith.mulf %118, %126 : vector<8x128xf32>
    %135 = arith.addf %133, %134 : vector<8x128xf32>
    %136 = math.tanh %135 : vector<8x128xf32>
    %137 = arith.mulf %132, %136 : vector<8x128xf32>
    %138 = arith.index_cast %c3_i32 : i32 to index
    %c0_36 = arith.constant 0 : index
    %c0_37 = arith.constant 0 : index
    %139 = vector.load %arg6[%138, %c0_36, %c0_37] : memref<4x8x128xf32, #tpu.memory_space<vmem>>, vector<1x8x128xf32>
    %140 = vector.shape_cast %139 : vector<1x8x128xf32> to vector<8x128xf32>
    %141 = vector.shape_cast %137 : vector<8x128xf32> to vector<1x8x128xf32>
    tpu.vector_store %arg6[%138, %c0_36, %c0_37], %141 {strides = array<i32>} : memref<4x8x128xf32, #tpu.memory_space<vmem>>, vector<1x8x128xf32>,
    %c4_i32 = arith.constant 4 : i32
    %c0_38 = arith.constant 0 : index
    %c0_39 = arith.constant 0 : index
    %142 = vector.load %arg9[%c0_38, %c0_39] : memref<8x128xf32, #tpu.memory_space<vmem>>, vector<8x128xf32>
    tpu.vector_store %arg9[%c0_38, %c0_39], %137 {strides = array<i32>} : memref<8x128xf32, #tpu.memory_space<vmem>>, vector<8x128xf32>,
    %c0_40 = arith.constant 0 : index
    %c0_41 = arith.constant 0 : index
    %143 = vector.load %arg10[%c0_40, %c0_41] : memref<8x128xf32, #tpu.memory_space<vmem>>, vector<8x128xf32>
    tpu.vector_store %arg10[%c0_40, %c0_41], %135 {strides = array<i32>} : memref<8x128xf32, #tpu.memory_space<vmem>>, vector<8x128xf32>,
    %c1_i32_42 = arith.constant 1 : i32
    %144 = arith.cmpi eq, %arg1, %c1_i32_42 : i32
    %145 = arith.extui %144 : i1 to i32
    %c0_i32_43 = arith.constant 0 : i32
    %146 = arith.cmpi ne, %145, %c0_i32_43 : i32
    scf.if %146 {
      %c0_44 = arith.constant 0 : index
      %c0_45 = arith.constant 0 : index
      %147 = vector.load %arg7[%c0_44, %c0_45] : memref<8x128xf32, #tpu.memory_space<vmem>>, vector<8x128xf32>
      tpu.vector_store %arg7[%c0_44, %c0_45], %137 {strides = array<i32>} : memref<8x128xf32, #tpu.memory_space<vmem>>, vector<8x128xf32>,
      %c0_46 = arith.constant 0 : index
      %c0_47 = arith.constant 0 : index
      %148 = vector.load %arg8[%c0_46, %c0_47] : memref<8x128xf32, #tpu.memory_space<vmem>>, vector<8x128xf32>
      tpu.vector_store %arg8[%c0_46, %c0_47], %135 {strides = array<i32>} : memref<8x128xf32, #tpu.memory_space<vmem>>, vector<8x128xf32>,
    } else {
    }
    return
  }
  func.func @transform_0(%arg0: i32, %arg1: i32) -> (i32, i32, i32) {
    %c0_i32 = arith.constant 0 : i32
    %c0_i32_0 = arith.constant 0 : i32
    return %arg1, %arg0, %c0_i32 : i32, i32, i32
  }
  func.func @transform_1(%arg0: i32, %arg1: i32) -> (i32, i32) {
    %c0_i32 = arith.constant 0 : i32
    %c0_i32_0 = arith.constant 0 : i32
    %c0_i32_1 = arith.constant 0 : i32
    return %c0_i32, %c0_i32_0 : i32, i32
  }
  func.func @transform_2(%arg0: i32, %arg1: i32) -> (i32, i32) {
    %c0_i32 = arith.constant 0 : i32
    %c0_i32_0 = arith.constant 0 : i32
    return %arg0, %c0_i32 : i32, i32
  }
  func.func @transform_3(%arg0: i32, %arg1: i32) -> (i32, i32) {
    %c0_i32 = arith.constant 0 : i32
    %c0_i32_0 = arith.constant 0 : i32
    return %arg0, %c0_i32 : i32, i32
  }
  func.func @transform_4(%arg0: i32, %arg1: i32) -> (i32, i32, i32) {
    %c0_i32 = arith.constant 0 : i32
    %c0_i32_0 = arith.constant 0 : i32
    return %arg1, %arg0, %c0_i32 : i32, i32, i32
  }
  func.func @transform_5(%arg0: i32, %arg1: i32) -> (i32, i32) {
    %c0_i32 = arith.constant 0 : i32
    %c0_i32_0 = arith.constant 0 : i32
    return %arg0, %c0_i32 : i32, i32
  }
  func.func @transform_6(%arg0: i32, %arg1: i32) -> (i32, i32) {
    %c0_i32 = arith.constant 0 : i32
    %c0_i32_0 = arith.constant 0 : i32
    return %arg0, %c0_i32 : i32, i32
  }
}

</mosaic_0001>

<llo_original>
// kernel: tpu_custom_call.1
$region0: #{tpu_custom_call.1}
  #allocation0 [shape = 'u32[]', space=smem, size = 0x4, offset = 0x4, fixed_abs, tag = 'smem constant byte address 0x4 - core index']
  #allocation1 [shape = 'u32[72,128]{1,0:T(1,128)}', space=vmem, size = 0x9000, scoped, tag = 'internal scratch']
  #allocation2 [shape = 'f32[8,128]{1,0:T(8,128)}', space=vmem, size = 0x1000, scoped, tag = 'scratch operand']
  #allocation3 [shape = 'f32[8,128]{1,0:T(8,128)}', space=vmem, size = 0x1000, scoped, tag = 'scratch operand']
  %s0 = inlined_call_operand.hbm [shape: f32[8,8,512], index: 0, kind: input, shape index: {}]
  %s1 = inlined_call_operand.hbm [shape: f32[128,512], index: 1, kind: input, shape index: {}]
  %s2 = inlined_call_operand.hbm [shape: f32[8,128], index: 2, kind: input, shape index: {}]
  %s3 = inlined_call_operand.hbm [shape: f32[8,128], index: 3, kind: input, shape index: {}]
  %s4 = inlined_call_operand.hbm [shape: f32[8,8,128], index: 4, kind: output, shape index: {0}]
  %s5 = inlined_call_operand.hbm [shape: f32[8,128], index: 5, kind: output, shape index: {1}]
  %s6 = inlined_call_operand.hbm [shape: f32[8,128], index: 6, kind: output, shape index: {2}]
  %7 = xla_tuple %s4, %s5, %s6
  %s8 = sld [smem:[#allocation0]]
  $region89: #{tpu_custom_call.1} parent=0
    _
  %s10 = ssub.s32 1, %s8
  %s11 = scalar_select 0, %s10, %s8
  $region1: #{tpu_custom_call.1} parent=0
    #allocation4 [shape = 'u8[131072]{0}', space=vmem, size = 0x20000, scoped, tag = 'input window, operand 0']
    #allocation5 [shape = 's32[2]{0}', space=sflag, size = 0x8, scoped, tag = 'scoped memory for tpu_custom_call.1']
    #allocation6 [shape = 's32[2]{0}', space=sflag, size = 0x8, scoped, tag = 'scoped memory for tpu_custom_call.1']
    #allocation7 [shape = 'u8[262144]{0}', space=vmem, size = 0x40000, scoped, tag = 'input window, operand 1, single buffered']
    #allocation8 [shape = 's32[1]{0}', space=sflag, size = 0x4, scoped, tag = 'scoped memory for tpu_custom_call.1']
    #allocation9 [shape = 'u8[4096]{0}', space=vmem, size = 0x1000, scoped, tag = 'input window, operand 2, single buffered']
    #allocation10 [shape = 'u8[4096]{0}', space=vmem, size = 0x1000, scoped, tag = 'input window, operand 3, single buffered']
    #allocation11 [shape = 's32[1]{0}', space=sflag, size = 0x4, scoped, tag = 'scoped memory for tpu_custom_call.1']
    #allocation12 [shape = 'u8[32768]{0}', space=vmem, size = 0x8000, scoped, tag = 'output window, operand 0']
    #allocation13 [shape = 'u8[4096]{0}', space=vmem, size = 0x1000, scoped, tag = 'output window, operand 1, single buffered']
    #allocation14 [shape = 's32[1]{0}', space=sflag, size = 0x4, scoped, tag = 'scoped memory for tpu_custom_call.1']
    #allocation15 [shape = 'u8[4096]{0}', space=vmem, size = 0x1000, scoped, tag = 'output window, operand 2, single buffered']
    %12 = vsyncpa [#allocation5], 0
    %s13 = scalar_lea.sflag [#allocation5], 1
    %14 = vsyncpa %s13, 0
    %15 = vsyncpa [#allocation8], 0
    %16 = vsyncpa [#allocation11], 0
    %17 = vsyncpa [#allocation6], 0
    %s18 = scalar_lea.sflag [#allocation6], 1
    %19 = vsyncpa %s18, 0
    %20 = vsyncpa [#allocation14], 0
    loop: start=0, step=1, limit=4
    $region2: #{tpu_custom_call.1} parent=1 // loop_pre_header
      _
    $region3: #{tpu_custom_call.1} parent=1 // loop_header
      %s22 = sphi 0, %s26
      %p23 = scmp.ge.s32.totalorder %s22, 4
      %s29 = sphi 0, %s41
      %s30 = sphi 0, %s37
      %s31 = sphi 0, %s29
      %s32 = sphi 0, %s30
      %s33 = sphi 0, %s31
      %s34 = sphi 0, %s32
      %s46 = sphi 0, %s48
      %s49 = sphi 0, %s46
      %s50 = sphi 0, %s49
      %s66 = sphi 0, %s50
      %s70 = sphi 0, %s70
      %s72 = sphi 0, %s70
      %s73 = sphi 0, %s72
      %s87 = sphi 0, %s73
      %s93 = sphi 0, %s95
      %s96 = sphi 0, %s93
      %s97 = sphi 0, %s96
      %s113 = sphi 0, %s97
      %s119 = sphi 0, %s121
      %s122 = sphi 0, %s119
      %s123 = sphi 0, %s122
      %s139 = sphi 0, %s123
      %s147 = sphi 0, %s149
      %s150 = sphi 0, %s147
      %s151 = sphi 0, %s150
      %s167 = sphi 0, %s151
      %s173 = sphi 0, %s175
      %s176 = sphi 0, %s173
      %s177 = sphi 0, %s176
      %s193 = sphi 0, %s177
      %s199 = sphi 0, %s201
      %s202 = sphi 0, %s199
      %s203 = sphi 0, %s202
      %s219 = sphi 0, %s203
    $region4: #{tpu_custom_call.1} parent=1 // loop_header_branch
      %25 = sbr.rel (%p23) target = $region8
    $region5: #{tpu_custom_call.1} parent=1 // loop_body
      %s27 = ssub.s32 %s22, 1
      %s28 = ssub.s32 %s22, 2
      %s35 = sadd.s32 1, %s30
      %p36 = scmp.ge.s32.totalorder %s35, 2
      %s37 = scalar_select %p36, 0, %s35
      %s38 = sadd.s32 1, %s29
      %s39 = scalar_select %p36, %s38, %s29
      %p40 = scmp.ge.s32.totalorder %s39, 1
      %s41 = scalar_select %p40, 0, %s39
      %s42 = ssub.s32 %s30, %s37
      %s43 = ssub.s32 %s29, %s41
      %s44 = sor.u32 %s42, %s43
      %p45 = scmp.eq.s32.totalorder %s44, 0
      %s47 = sadd.s32 %s46, 1
      %s48 = scalar_select %p45, %s46, %s47
      %p51 = pneg %p45
      %p52 = scmp.eq.s32.totalorder %s22, 1
      %p53 = por %p51, %p52
      %p54 = scmp.ne.s32.totalorder %s46, %s49
      %p55 = scmp.eq.s32.totalorder %s22, 0
      %p56 = por %p54, %p55
      %p57 = scmp.ne.s32.totalorder %s46, %s49
      %p58 = scmp.eq.s32.totalorder %s27, 1
      %p59 = por %p57, %p58
      %p60 = scmp.ne.s32.totalorder %s49, %s50
      %p61 = scmp.eq.s32.totalorder %s27, 0
      %p62 = por %p60, %p61
      %p63 = scmp.ne.s32.totalorder %s49, %s50
      %p64 = scmp.eq.s32.totalorder %s28, 1
      %p65 = por %p63, %p64
      %p67 = scmp.ne.s32.totalorder %s50, %s66
      %p68 = scmp.eq.s32.totalorder %s28, 0
      %p69 = por %p67, %p68
      %s71 = sadd.s32 %s70, 1
      %p74 = scmp.eq.s32.totalorder %s22, 1
      %p75 = scmp.ne.s32.totalorder %s70, %s72
      %p76 = scmp.eq.s32.totalorder %s22, 0
      %p77 = por %p75, %p76
      %p78 = scmp.ne.s32.totalorder %s70, %s72
      %p79 = scmp.eq.s32.totalorder %s27, 1
      %p80 = por %p78, %p79
      %p81 = scmp.ne.s32.totalorder %s72, %s73
      %p82 = scmp.eq.s32.totalorder %s27, 0
      %p83 = por %p81, %p82
      %p84 = scmp.ne.s32.totalorder %s72, %s73
      %p85 = scmp.eq.s32.totalorder %s28, 1
      %p86 = por %p84, %p85
      %p88 = scmp.ne.s32.totalorder %s73, %s87
      %p89 = scmp.eq.s32.totalorder %s28, 0
      %p90 = por %p88, %p89
      %s91 = ssub.s32 %s29, %s41
      %p92 = scmp.eq.s32.totalorder %s91, 0
      %s94 = sadd.s32 %s93, 1
      %s95 = scalar_select %p92, %s93, %s94
      %p98 = pneg %p92
      %p99 = scmp.eq.s32.totalorder %s22, 1
      %p100 = por %p98, %p99
      %p101 = scmp.ne.s32.totalorder %s93, %s96
      %p102 = scmp.eq.s32.totalorder %s22, 0
      %p103 = por %p101, %p102
      %p104 = scmp.ne.s32.totalorder %s93, %s96
      %p105 = scmp.eq.s32.totalorder %s27, 1
      %p106 = por %p104, %p105
      %p107 = scmp.ne.s32.totalorder %s96, %s97
      %p108 = scmp.eq.s32.totalorder %s27, 0
      %p109 = por %p107, %p108
      %p110 = scmp.ne.s32.totalorder %s96, %s97
      %p111 = scmp.eq.s32.totalorder %s28, 1
      %p112 = por %p110, %p111
      %p114 = scmp.ne.s32.totalorder %s97, %s113
      %p115 = scmp.eq.s32.totalorder %s28, 0
      %p116 = por %p114, %p115
      %s117 = ssub.s32 %s29, %s41
      %p118 = scmp.eq.s32.totalorder %s117, 0
      %s120 = sadd.s32 %s119, 1
      %s121 = scalar_select %p118, %s119, %s120
      %p124 = pneg %p118
      %p125 = scmp.eq.s32.totalorder %s22, 1
      %p126 = por %p124, %p125
      %p127 = scmp.ne.s32.totalorder %s119, %s122
      %p128 = scmp.eq.s32.totalorder %s22, 0
      %p129 = por %p127, %p128
      %p130 = scmp.ne.s32.totalorder %s119, %s122
      %p131 = scmp.eq.s32.totalorder %s27, 1
      %p132 = por %p130, %p131
      %p133 = scmp.ne.s32.totalorder %s122, %s123
      %p134 = scmp.eq.s32.totalorder %s27, 0
      %p135 = por %p133, %p134
      %p136 = scmp.ne.s32.totalorder %s122, %s123
      %p137 = scmp.eq.s32.totalorder %s28, 1
      %p138 = por %p136, %p137
      %p140 = scmp.ne.s32.totalorder %s123, %s139
      %p141 = scmp.eq.s32.totalorder %s28, 0
      %p142 = por %p140, %p141
      %s143 = ssub.s32 %s30, %s37
      %s144 = ssub.s32 %s29, %s41
      %s145 = sor.u32 %s143, %s144
      %p146 = scmp.eq.s32.totalorder %s145, 0
      %s148 = sadd.s32 %s147, 1
      %s149 = scalar_select %p146, %s147, %s148
      %p152 = pneg %p146
      %p153 = scmp.eq.s32.totalorder %s22, 1
      %p154 = por %p152, %p153
      %p155 = scmp.ne.s32.totalorder %s147, %s150
      %p156 = scmp.eq.s32.totalorder %s22, 0
      %p157 = por %p155, %p156
      %p158 = scmp.ne.s32.totalorder %s147, %s150
      %p159 = scmp.eq.s32.totalorder %s27, 1
      %p160 = por %p158, %p159
      %p161 = scmp.ne.s32.totalorder %s150, %s151
      %p162 = scmp.eq.s32.totalorder %s27, 0
      %p163 = por %p161, %p162
      %p164 = scmp.ne.s32.totalorder %s150, %s151
      %p165 = scmp.eq.s32.totalorder %s28, 1
      %p166 = por %p164, %p165
      %p168 = scmp.ne.s32.totalorder %s151, %s167
      %p169 = scmp.eq.s32.totalorder %s28, 0
      %p170 = por %p168, %p169
      %s171 = ssub.s32 %s29, %s41
      %p172 = scmp.eq.s32.totalorder %s171, 0
      %s174 = sadd.s32 %s173, 1
      %s175 = scalar_select %p172, %s173, %s174
      %p178 = pneg %p172
      %p179 = scmp.eq.s32.totalorder %s22, 1
      %p180 = por %p178, %p179
      %p181 = scmp.ne.s32.totalorder %s173, %s176
      %p182 = scmp.eq.s32.totalorder %s22, 0
      %p183 = por %p181, %p182
      %p184 = scmp.ne.s32.totalorder %s173, %s176
      %p185 = scmp.eq.s32.totalorder %s27, 1
      %p186 = por %p184, %p185
      %p187 = scmp.ne.s32.totalorder %s176, %s177
      %p188 = scmp.eq.s32.totalorder %s27, 0
      %p189 = por %p187, %p188
      %p190 = scmp.ne.s32.totalorder %s176, %s177
      %p191 = scmp.eq.s32.totalorder %s28, 1
      %p192 = por %p190, %p191
      %p194 = scmp.ne.s32.totalorder %s177, %s193
      %p195 = scmp.eq.s32.totalorder %s28, 0
      %p196 = por %p194, %p195
      %s197 = ssub.s32 %s29, %s41
      %p198 = scmp.eq.s32.totalorder %s197, 0
      %s200 = sadd.s32 %s199, 1
      %s201 = scalar_select %p198, %s199, %s200
      %p204 = pneg %p198
      %p205 = scmp.eq.s32.totalorder %s22, 1
      %p206 = por %p204, %p205
      %p207 = scmp.ne.s32.totalorder %s199, %s202
      %p208 = scmp.eq.s32.totalorder %s22, 0
      %p209 = por %p207, %p208
      %p210 = scmp.ne.s32.totalorder %s199, %s202
      %p211 = scmp.eq.s32.totalorder %s27, 1
      %p212 = por %p210, %p211
      %p213 = scmp.ne.s32.totalorder %s202, %s203
      %p214 = scmp.eq.s32.totalorder %s27, 0
      %p215 = por %p213, %p214
      %p216 = scmp.ne.s32.totalorder %s202, %s203
      %p217 = scmp.eq.s32.totalorder %s28, 1
      %p218 = por %p216, %p217
      %p220 = scmp.ne.s32.totalorder %s203, %s219
      %p221 = scmp.eq.s32.totalorder %s28, 0
      %p222 = por %p220, %p221
      %p223 = scmp.le.s32.totalorder 1, %s22
      %p224 = scmp.lt.s32.totalorder %s22, 3
      %p225 = pnand %p223, %p224
      %p226 = pneg %p225
      // Predicated region
      $region9: #{tpu_custom_call.1} parent=5 // pred_check
        _
      $region10: #{tpu_custom_call.1} parent=5 // pred_check_branch
        %228 = sbr.rel (%p225) target = $region12
      $region11: #{tpu_custom_call.1} parent=5 // pred_region
        %s229 = ssub.s32 %s22, 1
        // Predicated region
        $region13: #{tpu_custom_call.1} parent=11 // pred_check
          %p230 = pneg %p83
        $region14: #{tpu_custom_call.1} parent=11 // pred_check_branch
          %232 = sbr.rel (%p230) target = $region16
        $region15: #{tpu_custom_call.1} parent=11 // pred_region
          %234 = vsyncadd [#allocation8], 0
          %s235 = sshll.u32 %s1, 4
          %s236 = int_to_ptr.hbm [resolvable:$true] %s235
          %s237 = sshll.u32 [#allocation7], 4
          %s238 = int_to_ptr.vmem [resolvable:$true] %s237
          %243 = dma.hbm_to_vmem [thread:$0]  %s236, 8192, %s238, [#allocation8], 512, 512, 32
        $region16: #{tpu_custom_call.1} parent=11 // pred_fallthru
          _
        // Predicated region
        $region17: #{tpu_custom_call.1} parent=11 // pred_check
          %p244 = pneg %p109
        $region18: #{tpu_custom_call.1} parent=11 // pred_check_branch
          %246 = sbr.rel (%p244) target = $region20
        $region19: #{tpu_custom_call.1} parent=11 // pred_region
          %248 = vsyncadd [#allocation8], 0
          %s249 = smul.addr %s31, 8
          %s250 = scalar_lea.hbm %s2, %s249
          %s252 = sshll.u32 %s250, 4
          %s253 = int_to_ptr.hbm [resolvable:$true] %s252
          %s254 = sshll.u32 [#allocation9], 4
          %s255 = int_to_ptr.vmem [resolvable:$true] %s254
          %257 = dma.hbm_to_vmem [thread:$0]  %s253, 128, %s255, [#allocation8]
        $region20: #{tpu_custom_call.1} parent=11 // pred_fallthru
          _
        // Predicated region
        $region21: #{tpu_custom_call.1} parent=11 // pred_check
          %p258 = pneg %p135
        $region22: #{tpu_custom_call.1} parent=11 // pred_check_branch
          %260 = sbr.rel (%p258) target = $region24
        $region23: #{tpu_custom_call.1} parent=11 // pred_region
          %262 = vsyncadd [#allocation11], 0
          %s263 = smul.addr %s31, 8
          %s264 = scalar_lea.hbm %s3, %s263
          %s266 = sshll.u32 %s264, 4
          %s267 = int_to_ptr.hbm [resolvable:$true] %s266
          %s268 = sshll.u32 [#allocation10], 4
          %s269 = int_to_ptr.vmem [resolvable:$true] %s268
          %271 = dma.hbm_to_vmem [thread:$0]  %s267, 128, %s269, [#allocation11]
        $region24: #{tpu_custom_call.1} parent=11 // pred_fallthru
          _
      $region12: #{tpu_custom_call.1} parent=5 // pred_fallthru
        _
      %p272 = scmp.lt.s32.totalorder %s22, 2
      // Predicated region
      $region25: #{tpu_custom_call.1} parent=5 // pred_check
        %p273 = pneg %p272
      $region26: #{tpu_custom_call.1} parent=5 // pred_check_branch
        %275 = sbr.rel (%p273) target = $region28
      $region27: #{tpu_custom_call.1} parent=5 // pred_region
        // Predicated region
        $region29: #{tpu_custom_call.1} parent=27 // pred_check
          %p276 = pneg %p56
        $region30: #{tpu_custom_call.1} parent=27 // pred_check_branch
          %278 = sbr.rel (%p276) target = $region32
        $region31: #{tpu_custom_call.1} parent=27 // pred_region
          %s279 = sand.u32 %s46, 1
          %s280 = scalar_lea.sflag [#allocation5], %s279
          %s281 = sand.u32 %s46, 1
          %s282 = smul.addr %s281, 128
          %s283 = scalar_lea.vmem [#allocation4], %s282
          %s284 = smul.u32 4, %s30
          %286 = vsyncadd %s280, 0
          %s287 = smul.addr %s29, 4
          %s288 = smul.addr %s284, 4
          %s289 = sadd.s32 %s287, %s288
          %s290 = smul.addr %s289, 8
          %s291 = scalar_lea.hbm %s0, %s290
          %s292 = sshll.u32 %s291, 4
          %s293 = int_to_ptr.hbm [resolvable:$true] %s292
          %s294 = sshll.u32 %s283, 4
          %s295 = int_to_ptr.vmem [resolvable:$true] %s294
          %300 = dma.hbm_to_vmem [thread:$0]  %s293, 2048, %s295, %s280, 512, 512, 32
        $region32: #{tpu_custom_call.1} parent=27 // pred_fallthru
          _
      $region28: #{tpu_custom_call.1} parent=5 // pred_fallthru
        _
      %p301 = scmp.le.s32.totalorder 1, %s22
      %p302 = scmp.lt.s32.totalorder %s22, 3
      %p303 = pnand %p301, %p302
      %p304 = pneg %p303
      // Predicated region
      $region33: #{tpu_custom_call.1} parent=5 // pred_check
        _
      $region34: #{tpu_custom_call.1} parent=5 // pred_check_branch
        %306 = sbr.rel (%p303) target = $region36
      $region35: #{tpu_custom_call.1} parent=5 // pred_region
        %s307 = ssub.s32 %s22, 1
        %s308 = sand.u32 %s49, 1
        %s309 = scalar_lea.sflag [#allocation5], %s308
        %s310 = sand.u32 %s49, 1
        %s311 = smul.addr %s310, 128
        %s312 = scalar_lea.vmem [#allocation4], %s311
        // Predicated region
        $region37: #{tpu_custom_call.1} parent=35 // pred_check
          %p313 = pneg %p62
        $region38: #{tpu_custom_call.1} parent=35 // pred_check_branch
          %315 = sbr.rel (%p313) target = $region40
        $region39: #{tpu_custom_call.1} parent=35 // pred_region
          %317 = dma.done %s309, 2048
        $region40: #{tpu_custom_call.1} parent=35 // pred_fallthru
          _
        // Predicated region
        $region41: #{tpu_custom_call.1} parent=35 // pred_check
          %p318 = pneg %p83
        $region42: #{tpu_custom_call.1} parent=35 // pred_check_branch
          %320 = sbr.rel (%p318) target = $region44
        $region43: #{tpu_custom_call.1} parent=35 // pred_region
          %322 = dma.done [#allocation8], 8192
        $region44: #{tpu_custom_call.1} parent=35 // pred_fallthru
          _
        // Predicated region
        $region45: #{tpu_custom_call.1} parent=35 // pred_check
          %p323 = pneg %p109
        $region46: #{tpu_custom_call.1} parent=35 // pred_check_branch
          %325 = sbr.rel (%p323) target = $region48
        $region47: #{tpu_custom_call.1} parent=35 // pred_region
          %327 = dma.done [#allocation8], 128
        $region48: #{tpu_custom_call.1} parent=35 // pred_fallthru
          _
        // Predicated region
        $region49: #{tpu_custom_call.1} parent=35 // pred_check
          %p328 = pneg %p135
        $region50: #{tpu_custom_call.1} parent=35 // pred_check_branch
          %330 = sbr.rel (%p328) target = $region52
        $region51: #{tpu_custom_call.1} parent=35 // pred_region
          %332 = dma.done [#allocation11], 128
        $region52: #{tpu_custom_call.1} parent=35 // pred_fallthru
          _
        %s333 = sand.u32 %s49, 1
        %s334 = scalar_lea.sflag [#allocation5], %s333
        %s335 = sand.u32 %s49, 1
        %s336 = smul.addr %s335, 128
        %s337 = scalar_lea.vmem [#allocation4], %s336
        %p338 = pneg %p62
        %p339 = pneg %p59
        %p340 = pneg %p83
        %p341 = pneg %p80
        %p342 = pneg %p109
        %p343 = pneg %p106
        %p344 = pneg %p135
        %p345 = pneg %p132
        %p346 = pneg %p163
        %p347 = pneg %p160
        %s348 = sand.u32 %s150, 1
        %s349 = scalar_lea.sflag [#allocation6], %s348
        %s350 = sand.u32 %s150, 1
        %s351 = smul.addr %s350, 32
        %s352 = scalar_lea.vmem [#allocation12], %s351
        %p353 = pneg %p189
        %p354 = pneg %p186
        %p355 = pneg %p215
        %p356 = pneg %p212
        %s357 = smul.u32 4, %s32
        %s358 = smul.u32 4, %s32
        %p359 = scmp.eq.s32.totalorder %s32, 0
        // Predicated region
        $region53: #{tpu_custom_call.1} parent=35 // pred_check
          %p360 = pneg %p359
        $region54: #{tpu_custom_call.1} parent=35 // pred_check_branch
          %362 = sbr.rel (%p360) target = $region56
        $region55: #{tpu_custom_call.1} parent=35 // pred_region
          %v363 = vld [vmem:[#allocation9] sm:$0xff]
          %364 = vst [vmem:[#allocation2] sm:$0xff] %v363
          %v365 = vld [vmem:[#allocation10] sm:$0xff]
          %366 = vst [vmem:[#allocation3] sm:$0xff] %v365
        $region56: #{tpu_custom_call.1} parent=35 // pred_fallthru
          _
        %v367 = vld [vmem:[#allocation7] sm:$0xff]
        %v368 = vld [vmem:[#allocation7 + $0x8] sm:$0xff]
        %v369 = vld [vmem:[#allocation7 + $0x10] sm:$0xff]
        %v370 = vld [vmem:[#allocation7 + $0x18] sm:$0xff]
        %v371 = vld [vmem:[#allocation7 + $0x20] sm:$0xff]
        %v372 = vld [vmem:[#allocation7 + $0x28] sm:$0xff]
        %v373 = vld [vmem:[#allocation7 + $0x30] sm:$0xff]
        %v374 = vld [vmem:[#allocation7 + $0x38] sm:$0xff]
        %v375 = vld [vmem:[#allocation7 + $0x40] sm:$0xff]
        %v376 = vld [vmem:[#allocation7 + $0x48] sm:$0xff]
        %v377 = vld [vmem:[#allocation7 + $0x50] sm:$0xff]
        %v378 = vld [vmem:[#allocation7 + $0x58] sm:$0xff]
        %v379 = vld [vmem:[#allocation7 + $0x60] sm:$0xff]
        %v380 = vld [vmem:[#allocation7 + $0x68] sm:$0xff]
        %v381 = vld [vmem:[#allocation7 + $0x70] sm:$0xff]
        %v382 = vld [vmem:[#allocation7 + $0x78] sm:$0xff]
        %v383 = vld [vmem:[#allocation7 + $0x80] sm:$0xff]
        %v384 = vld [vmem:[#allocation7 + $0x88] sm:$0xff]
        %v385 = vld [vmem:[#allocation7 + $0x90] sm:$0xff]
        %v386 = vld [vmem:[#allocation7 + $0x98] sm:$0xff]
        %v387 = vld [vmem:[#allocation7 + $0xa0] sm:$0xff]
        %v388 = vld [vmem:[#allocation7 + $0xa8] sm:$0xff]
        %v389 = vld [vmem:[#allocation7 + $0xb0] sm:$0xff]
        %v390 = vld [vmem:[#allocation7 + $0xb8] sm:$0xff]
        %v391 = vld [vmem:[#allocation7 + $0xc0] sm:$0xff]
        %v392 = vld [vmem:[#allocation7 + $0xc8] sm:$0xff]
        %v393 = vld [vmem:[#allocation7 + $0xd0] sm:$0xff]
        %v394 = vld [vmem:[#allocation7 + $0xd8] sm:$0xff]
        %v395 = vld [vmem:[#allocation7 + $0xe0] sm:$0xff]
        %v396 = vld [vmem:[#allocation7 + $0xe8] sm:$0xff]
        %v397 = vld [vmem:[#allocation7 + $0xf0] sm:$0xff]
        %v398 = vld [vmem:[#allocation7 + $0xf8] sm:$0xff]
        %v399 = vld [vmem:[#allocation7 + $0x100] sm:$0xff]
        %v400 = vld [vmem:[#allocation7 + $0x108] sm:$0xff]
        %v401 = vld [vmem:[#allocation7 + $0x110] sm:$0xff]
        %v402 = vld [vmem:[#allocation7 + $0x118] sm:$0xff]
        %v403 = vld [vmem:[#allocation7 + $0x120] sm:$0xff]
        %v404 = vld [vmem:[#allocation7 + $0x128] sm:$0xff]
        %v405 = vld [vmem:[#allocation7 + $0x130] sm:$0xff]
        %v406 = vld [vmem:[#allocation7 + $0x138] sm:$0xff]
        %v407 = vld [vmem:[#allocation7 + $0x140] sm:$0xff]
        %v408 = vld [vmem:[#allocation7 + $0x148] sm:$0xff]
        %v409 = vld [vmem:[#allocation7 + $0x150] sm:$0xff]
        %v410 = vld [vmem:[#allocation7 + $0x158] sm:$0xff]
        %v411 = vld [vmem:[#allocation7 + $0x160] sm:$0xff]
        %v412 = vld [vmem:[#allocation7 + $0x168] sm:$0xff]
        %v413 = vld [vmem:[#allocation7 + $0x170] sm:$0xff]
        %v414 = vld [vmem:[#allocation7 + $0x178] sm:$0xff]
        %v415 = vld [vmem:[#allocation7 + $0x180] sm:$0xff]
        %v416 = vld [vmem:[#allocation7 + $0x188] sm:$0xff]
        %v417 = vld [vmem:[#allocation7 + $0x190] sm:$0xff]
        %v418 = vld [vmem:[#allocation7 + $0x198] sm:$0xff]
        %v419 = vld [vmem:[#allocation7 + $0x1a0] sm:$0xff]
        %v420 = vld [vmem:[#allocation7 + $0x1a8] sm:$0xff]
        %v421 = vld [vmem:[#allocation7 + $0x1b0] sm:$0xff]
        %v422 = vld [vmem:[#allocation7 + $0x1b8] sm:$0xff]
        %v423 = vld [vmem:[#allocation7 + $0x1c0] sm:$0xff]
        %v424 = vld [vmem:[#allocation7 + $0x1c8] sm:$0xff]
        %v425 = vld [vmem:[#allocation7 + $0x1d0] sm:$0xff]
        %v426 = vld [vmem:[#allocation7 + $0x1d8] sm:$0xff]
        %v427 = vld [vmem:[#allocation7 + $0x1e0] sm:$0xff]
        %v428 = vld [vmem:[#allocation7 + $0x1e8] sm:$0xff]
        %v429 = vld [vmem:[#allocation7 + $0x1f0] sm:$0xff]
        %v430 = vld [vmem:[#allocation7 + $0x1f8] sm:$0xff]
        %v431 = vld [vmem:[#allocation2] sm:$0xff]
        %v432 = vld [vmem:[#allocation3] sm:$0xff]
        %v433 = vld [vmem:[%s312] sm:$0xff]
        %v434 = vld [vmem:[%s312 + $0x8] sm:$0xff]
        %v435 = vld [vmem:[%s312 + $0x10] sm:$0xff]
        %v436 = vld [vmem:[%s312 + $0x18] sm:$0xff]
        %437 = vmatpush.msra.mxu0 %v427
        %438 = vmatpush.msra.mxu0 %v423
        %439 = vmatpush.msra.mxu0 %v419
        %440 = vmatpush.msra.mxu0 %v415
        %441 = vmatpush.msra.mxu0 %v411
        %442 = vmatpush.msra.mxu0 %v407
        %443 = vmatpush.msra.mxu0 %v403
        %444 = vmatpush.msra.mxu0 %v399
        %445 = vmatpush.msra.mxu0 %v395
        %446 = vmatpush.msra.mxu0 %v391
        %447 = vmatpush.msra.mxu0 %v387
        %448 = vmatpush.msra.mxu0 %v383
        %449 = vmatpush.msra.mxu0 %v379
        %450 = vmatpush.msra.mxu0 %v375
        %451 = vmatpush.msra.mxu0 %v371
        %452 = vmatpush.msra.mxu0 %v367
        %453 = vmatmul.f32.gmra.mxu0 %v431
        %v454 = vpop.f32.mrf.mxu0
        %v455 = vadd.f32 0.0, %v454
        %456 = vdwg.mxu0
        %457 = vmatpush.msra.mxu0 %v428
        %458 = vmatpush.msra.mxu0 %v424
        %459 = vmatpush.msra.mxu0 %v420
        %460 = vmatpush.msra.mxu0 %v416
        %461 = vmatpush.msra.mxu0 %v412
        %462 = vmatpush.msra.mxu0 %v408
        %463 = vmatpush.msra.mxu0 %v404
        %464 = vmatpush.msra.mxu0 %v400
        %465 = vmatpush.msra.mxu0 %v396
        %466 = vmatpush.msra.mxu0 %v392
        %467 = vmatpush.msra.mxu0 %v388
        %468 = vmatpush.msra.mxu0 %v384
        %469 = vmatpush.msra.mxu0 %v380
        %470 = vmatpush.msra.mxu0 %v376
        %471 = vmatpush.msra.mxu0 %v372
        %472 = vmatpush.msra.mxu0 %v368
        %473 = vmatmul.f32.gmra.mxu0 %v431
        %v474 = vpop.f32.mrf.mxu0
        %v475 = vadd.f32 0.0, %v474
        %476 = vdwg.mxu0
        %477 = vmatpush.msra.mxu0 %v429
        %478 = vmatpush.msra.mxu0 %v425
        %479 = vmatpush.msra.mxu0 %v421
        %480 = vmatpush.msra.mxu0 %v417
        %481 = vmatpush.msra.mxu0 %v413
        %482 = vmatpush.msra.mxu0 %v409
        %483 = vmatpush.msra.mxu0 %v405
        %484 = vmatpush.msra.mxu0 %v401
        %485 = vmatpush.msra.mxu0 %v397
        %486 = vmatpush.msra.mxu0 %v393
        %487 = vmatpush.msra.mxu0 %v389
        %488 = vmatpush.msra.mxu0 %v385
        %489 = vmatpush.msra.mxu0 %v381
        %490 = vmatpush.msra.mxu0 %v377
        %491 = vmatpush.msra.mxu0 %v373
        %492 = vmatpush.msra.mxu0 %v369
        %493 = vmatmul.f32.gmra.mxu0 %v431
        %v494 = vpop.f32.mrf.mxu0
        %v495 = vadd.f32 0.0, %v494
        %496 = vdwg.mxu0
        %497 = vmatpush.msra.mxu0 %v430
        %498 = vmatpush.msra.mxu0 %v426
        %499 = vmatpush.msra.mxu0 %v422
        %500 = vmatpush.msra.mxu0 %v418
        %501 = vmatpush.msra.mxu0 %v414
        %502 = vmatpush.msra.mxu0 %v410
        %503 = vmatpush.msra.mxu0 %v406
        %504 = vmatpush.msra.mxu0 %v402
        %505 = vmatpush.msra.mxu0 %v398
        %506 = vmatpush.msra.mxu0 %v394
        %507 = vmatpush.msra.mxu0 %v390
        %508 = vmatpush.msra.mxu0 %v386
        %509 = vmatpush.msra.mxu0 %v382
        %510 = vmatpush.msra.mxu0 %v378
        %511 = vmatpush.msra.mxu0 %v374
        %512 = vmatpush.msra.mxu0 %v370
        %513 = vmatmul.f32.gmra.mxu0 %v431
        %v514 = vpop.f32.mrf.mxu0
        %v515 = vadd.f32 0.0, %v514
        %516 = vdwg.mxu0
        %v517 = vadd.f32 %v433, %v455
        %v518 = vadd.f32 %v434, %v475
        %v519 = vadd.f32 %v435, %v495
        %v520 = vadd.f32 %v436, %v515
        %v521 = vxor.u32 %v517, 2147483648
        %v522 = vmul.f32 %v521, 1.442695
        %v523 = vpow.pop %v522
        %v524 = vadd.f32 %v523, 1.0
        %v525 = vrcp.pop %v524
        %v526 = vmul.f32 %v524, %v525
        %v527 = vsub.f32 1.0, %v526
        %v528 = vmul.f32 %v525, %v527
        %v529 = vadd.f32 %v525, %v528
        %vm530 = vweird.f32 %v524
        %vm531 = vweird.f32 %v525
        %vm532 = vmor %vm530, %vm531
        %v533 = vsel %vm532, %v525, %v529
        %v534 = vand.u32 2147483647, %v524
        %vm535 = vcmp.eq.f32.partialorder %v534, 8.507059e+37
        %v536 = vand.u32 %v524, 2147483648
        %v537 = vor.u32 1.1754944e-38, %v536
        %v538 = vsel %vm535, %v537, %v533
        %v539 = vmul.f32 1.0, %v538
        %v540 = vxor.u32 %v518, 2147483648
        %v541 = vmul.f32 %v540, 1.442695
        %v542 = vpow.pop %v541
        %v543 = vadd.f32 %v542, 1.0
        %v544 = vrcp.pop %v543
        %v545 = vmul.f32 %v543, %v544
        %v546 = vsub.f32 1.0, %v545
        %v547 = vmul.f32 %v544, %v546
        %v548 = vadd.f32 %v544, %v547
        %vm549 = vweird.f32 %v543
        %vm550 = vweird.f32 %v544
        %vm551 = vmor %vm549, %vm550
        %v552 = vsel %vm551, %v544, %v548
        %v553 = vand.u32 2147483647, %v543
        %vm554 = vcmp.eq.f32.partialorder %v553, 8.507059e+37
        %v555 = vand.u32 %v543, 2147483648
        %v556 = vor.u32 1.1754944e-38, %v555
        %v557 = vsel %vm554, %v556, %v552
        %v558 = vmul.f32 1.0, %v557
        %v559 = vtanh.pop %v519
        %v560 = vxor.u32 %v520, 2147483648
        %v561 = vmul.f32 %v560, 1.442695
        %v562 = vpow.pop %v561
        %v563 = vadd.f32 %v562, 1.0
        %v564 = vrcp.pop %v563
        %v565 = vmul.f32 %v563, %v564
        %v566 = vsub.f32 1.0, %v565
        %v567 = vmul.f32 %v564, %v566
        %v568 = vadd.f32 %v564, %v567
        %vm569 = vweird.f32 %v563
        %vm570 = vweird.f32 %v564
        %vm571 = vmor %vm569, %vm570
        %v572 = vsel %vm571, %v564, %v568
        %v573 = vand.u32 2147483647, %v563
        %vm574 = vcmp.eq.f32.partialorder %v573, 8.507059e+37
        %v575 = vand.u32 %v563, 2147483648
        %v576 = vor.u32 1.1754944e-38, %v575
        %v577 = vsel %vm574, %v576, %v572
        %v578 = vmul.f32 1.0, %v577
        %v579 = vmul.f32 %v558, %v432
        %v580 = vmul.f32 %v539, %v559
        %v581 = vadd.f32 %v579, %v580
        %v582 = vtanh.pop %v581
        %v583 = vmul.f32 %v578, %v582
        %584 = vst [vmem:[%s352] sm:$0xff] %v583
        %s585 = scalar_lea.vmem %s312, 32 [#allocation4]
        %v586 = vld [vmem:[%s585] sm:$0xff]
        %v587 = vld [vmem:[%s585 + $0x8] sm:$0xff]
        %v588 = vld [vmem:[%s585 + $0x10] sm:$0xff]
        %v589 = vld [vmem:[%s585 + $0x18] sm:$0xff]
        %590 = vmatpush.msra.mxu0 %v427
        %591 = vmatpush.msra.mxu0 %v423
        %592 = vmatpush.msra.mxu0 %v419
        %593 = vmatpush.msra.mxu0 %v415
        %594 = vmatpush.msra.mxu0 %v411
        %595 = vmatpush.msra.mxu0 %v407
        %596 = vmatpush.msra.mxu0 %v403
        %597 = vmatpush.msra.mxu0 %v399
        %598 = vmatpush.msra.mxu0 %v395
        %599 = vmatpush.msra.mxu0 %v391
        %600 = vmatpush.msra.mxu0 %v387
        %601 = vmatpush.msra.mxu0 %v383
        %602 = vmatpush.msra.mxu0 %v379
        %603 = vmatpush.msra.mxu0 %v375
        %604 = vmatpush.msra.mxu0 %v371
        %605 = vmatpush.msra.mxu0 %v367
        %606 = vmatmul.f32.gmra.mxu0 %v583
        %v607 = vpop.f32.mrf.mxu0
        %v608 = vadd.f32 0.0, %v607
        %609 = vdwg.mxu0
        %610 = vmatpush.msra.mxu0 %v428
        %611 = vmatpush.msra.mxu0 %v424
        %612 = vmatpush.msra.mxu0 %v420
        %613 = vmatpush.msra.mxu0 %v416
        %614 = vmatpush.msra.mxu0 %v412
        %615 = vmatpush.msra.mxu0 %v408
        %616 = vmatpush.msra.mxu0 %v404
        %617 = vmatpush.msra.mxu0 %v400
        %618 = vmatpush.msra.mxu0 %v396
        %619 = vmatpush.msra.mxu0 %v392
        %620 = vmatpush.msra.mxu0 %v388
        %621 = vmatpush.msra.mxu0 %v384
        %622 = vmatpush.msra.mxu0 %v380
        %623 = vmatpush.msra.mxu0 %v376
        %624 = vmatpush.msra.mxu0 %v372
        %625 = vmatpush.msra.mxu0 %v368
        %626 = vmatmul.f32.gmra.mxu0 %v583
        %v627 = vpop.f32.mrf.mxu0
        %v628 = vadd.f32 0.0, %v627
        %629 = vdwg.mxu0
        %630 = vmatpush.msra.mxu0 %v429
        %631 = vmatpush.msra.mxu0 %v425
        %632 = vmatpush.msra.mxu0 %v421
        %633 = vmatpush.msra.mxu0 %v417
        %634 = vmatpush.msra.mxu0 %v413
        %635 = vmatpush.msra.mxu0 %v409
        %636 = vmatpush.msra.mxu0 %v405
        %637 = vmatpush.msra.mxu0 %v401
        %638 = vmatpush.msra.mxu0 %v397
        %639 = vmatpush.msra.mxu0 %v393
        %640 = vmatpush.msra.mxu0 %v389
        %641 = vmatpush.msra.mxu0 %v385
        %642 = vmatpush.msra.mxu0 %v381
        %643 = vmatpush.msra.mxu0 %v377
        %644 = vmatpush.msra.mxu0 %v373
        %645 = vmatpush.msra.mxu0 %v369
        %646 = vmatmul.f32.gmra.mxu0 %v583
        %v647 = vpop.f32.mrf.mxu0
        %v648 = vadd.f32 0.0, %v647
        %649 = vdwg.mxu0
        %650 = vmatpush.msra.mxu0 %v430
        %651 = vmatpush.msra.mxu0 %v426
        %652 = vmatpush.msra.mxu0 %v422
        %653 = vmatpush.msra.mxu0 %v418
        %654 = vmatpush.msra.mxu0 %v414
        %655 = vmatpush.msra.mxu0 %v410
        %656 = vmatpush.msra.mxu0 %v406
        %657 = vmatpush.msra.mxu0 %v402
        %658 = vmatpush.msra.mxu0 %v398
        %659 = vmatpush.msra.mxu0 %v394
        %660 = vmatpush.msra.mxu0 %v390
        %661 = vmatpush.msra.mxu0 %v386
        %662 = vmatpush.msra.mxu0 %v382
        %663 = vmatpush.msra.mxu0 %v378
        %664 = vmatpush.msra.mxu0 %v374
        %665 = vmatpush.msra.mxu0 %v370
        %666 = vmatmul.f32.gmra.mxu0 %v583
        %v667 = vpop.f32.mrf.mxu0
        %v668 = vadd.f32 0.0, %v667
        %669 = vdwg.mxu0
        %v670 = vadd.f32 %v586, %v608
        %v671 = vadd.f32 %v587, %v628
        %v672 = vadd.f32 %v588, %v648
        %v673 = vadd.f32 %v589, %v668
        %v674 = vxor.u32 %v670, 2147483648
        %v675 = vmul.f32 %v674, 1.442695
        %v676 = vpow.pop %v675
        %v677 = vadd.f32 %v676, 1.0
        %v678 = vrcp.pop %v677
        %v679 = vmul.f32 %v677, %v678
        %v680 = vsub.f32 1.0, %v679
        %v681 = vmul.f32 %v678, %v680
        %v682 = vadd.f32 %v678, %v681
        %vm683 = vweird.f32 %v677
        %vm684 = vweird.f32 %v678
        %vm685 = vmor %vm683, %vm684
        %v686 = vsel %vm685, %v678, %v682
        %v687 = vand.u32 2147483647, %v677
        %vm688 = vcmp.eq.f32.partialorder %v687, 8.507059e+37
        %v689 = vand.u32 %v677, 2147483648
        %v690 = vor.u32 1.1754944e-38, %v689
        %v691 = vsel %vm688, %v690, %v686
        %v692 = vmul.f32 1.0, %v691
        %v693 = vxor.u32 %v671, 2147483648
        %v694 = vmul.f32 %v693, 1.442695
        %v695 = vpow.pop %v694
        %v696 = vadd.f32 %v695, 1.0
        %v697 = vrcp.pop %v696
        %v698 = vmul.f32 %v696, %v697
        %v699 = vsub.f32 1.0, %v698
        %v700 = vmul.f32 %v697, %v699
        %v701 = vadd.f32 %v697, %v700
        %vm702 = vweird.f32 %v696
        %vm703 = vweird.f32 %v697
        %vm704 = vmor %vm702, %vm703
        %v705 = vsel %vm704, %v697, %v701
        %v706 = vand.u32 2147483647, %v696
        %vm707 = vcmp.eq.f32.partialorder %v706, 8.507059e+37
        %v708 = vand.u32 %v696, 2147483648
        %v709 = vor.u32 1.1754944e-38, %v708
        %v710 = vsel %vm707, %v709, %v705
        %v711 = vmul.f32 1.0, %v710
        %v712 = vtanh.pop %v672
        %v713 = vxor.u32 %v673, 2147483648
        %v714 = vmul.f32 %v713, 1.442695
        %v715 = vpow.pop %v714
        %v716 = vadd.f32 %v715, 1.0
        %v717 = vrcp.pop %v716
        %v718 = vmul.f32 %v716, %v717
        %v719 = vsub.f32 1.0, %v718
        %v720 = vmul.f32 %v717, %v719
        %v721 = vadd.f32 %v717, %v720
        %vm722 = vweird.f32 %v716
        %vm723 = vweird.f32 %v717
        %vm724 = vmor %vm722, %vm723
        %v725 = vsel %vm724, %v717, %v721
        %v726 = vand.u32 2147483647, %v716
        %vm727 = vcmp.eq.f32.partialorder %v726, 8.507059e+37
        %v728 = vand.u32 %v716, 2147483648
        %v729 = vor.u32 1.1754944e-38, %v728
        %v730 = vsel %vm727, %v729, %v725
        %v731 = vmul.f32 1.0, %v730
        %v732 = vmul.f32 %v711, %v581
        %v733 = vmul.f32 %v692, %v712
        %v734 = vadd.f32 %v732, %v733
        %v735 = vtanh.pop %v734
        %v736 = vmul.f32 %v731, %v735
        %s737 = scalar_lea.vmem %s352, 8 [#allocation12]
        %738 = vst [vmem:[%s737] sm:$0xff] %v736
        %s739 = scalar_lea.vmem %s312, 64 [#allocation4]
        %v740 = vld [vmem:[%s739] sm:$0xff]
        %v741 = vld [vmem:[%s739 + $0x8] sm:$0xff]
        %v742 = vld [vmem:[%s739 + $0x10] sm:$0xff]
        %v743 = vld [vmem:[%s739 + $0x18] sm:$0xff]
        %744 = vmatpush.msra.mxu0 %v427
        %745 = vmatpush.msra.mxu0 %v423
        %746 = vmatpush.msra.mxu0 %v419
        %747 = vmatpush.msra.mxu0 %v415
        %748 = vmatpush.msra.mxu0 %v411
        %749 = vmatpush.msra.mxu0 %v407
        %750 = vmatpush.msra.mxu0 %v403
        %751 = vmatpush.msra.mxu0 %v399
        %752 = vmatpush.msra.mxu0 %v395
        %753 = vmatpush.msra.mxu0 %v391
        %754 = vmatpush.msra.mxu0 %v387
        %755 = vmatpush.msra.mxu0 %v383
        %756 = vmatpush.msra.mxu0 %v379
        %757 = vmatpush.msra.mxu0 %v375
        %758 = vmatpush.msra.mxu0 %v371
        %759 = vmatpush.msra.mxu0 %v367
        %760 = vmatmul.f32.gmra.mxu0 %v736
        %v761 = vpop.f32.mrf.mxu0
        %v762 = vadd.f32 0.0, %v761
        %763 = vdwg.mxu0
        %764 = vmatpush.msra.mxu0 %v428
        %765 = vmatpush.msra.mxu0 %v424
        %766 = vmatpush.msra.mxu0 %v420
        %767 = vmatpush.msra.mxu0 %v416
        %768 = vmatpush.msra.mxu0 %v412
        %769 = vmatpush.msra.mxu0 %v408
        %770 = vmatpush.msra.mxu0 %v404
        %771 = vmatpush.msra.mxu0 %v400
        %772 = vmatpush.msra.mxu0 %v396
        %773 = vmatpush.msra.mxu0 %v392
        %774 = vmatpush.msra.mxu0 %v388
        %775 = vmatpush.msra.mxu0 %v384
        %776 = vmatpush.msra.mxu0 %v380
        %777 = vmatpush.msra.mxu0 %v376
        %778 = vmatpush.msra.mxu0 %v372
        %779 = vmatpush.msra.mxu0 %v368
        %780 = vmatmul.f32.gmra.mxu0 %v736
        %v781 = vpop.f32.mrf.mxu0
        %v782 = vadd.f32 0.0, %v781
        %783 = vdwg.mxu0
        %784 = vmatpush.msra.mxu0 %v429
        %785 = vmatpush.msra.mxu0 %v425
        %786 = vmatpush.msra.mxu0 %v421
        %787 = vmatpush.msra.mxu0 %v417
        %788 = vmatpush.msra.mxu0 %v413
        %789 = vmatpush.msra.mxu0 %v409
        %790 = vmatpush.msra.mxu0 %v405
        %791 = vmatpush.msra.mxu0 %v401
        %792 = vmatpush.msra.mxu0 %v397
        %793 = vmatpush.msra.mxu0 %v393
        %794 = vmatpush.msra.mxu0 %v389
        %795 = vmatpush.msra.mxu0 %v385
        %796 = vmatpush.msra.mxu0 %v381
        %797 = vmatpush.msra.mxu0 %v377
        %798 = vmatpush.msra.mxu0 %v373
        %799 = vmatpush.msra.mxu0 %v369
        %800 = vmatmul.f32.gmra.mxu0 %v736
        %v801 = vpop.f32.mrf.mxu0
        %v802 = vadd.f32 0.0, %v801
        %803 = vdwg.mxu0
        %804 = vmatpush.msra.mxu0 %v430
        %805 = vmatpush.msra.mxu0 %v426
        %806 = vmatpush.msra.mxu0 %v422
        %807 = vmatpush.msra.mxu0 %v418
        %808 = vmatpush.msra.mxu0 %v414
        %809 = vmatpush.msra.mxu0 %v410
        %810 = vmatpush.msra.mxu0 %v406
        %811 = vmatpush.msra.mxu0 %v402
        %812 = vmatpush.msra.mxu0 %v398
        %813 = vmatpush.msra.mxu0 %v394
        %814 = vmatpush.msra.mxu0 %v390
        %815 = vmatpush.msra.mxu0 %v386
        %816 = vmatpush.msra.mxu0 %v382
        %817 = vmatpush.msra.mxu0 %v378
        %818 = vmatpush.msra.mxu0 %v374
        %819 = vmatpush.msra.mxu0 %v370
        %820 = vmatmul.f32.gmra.mxu0 %v736
        %v821 = vpop.f32.mrf.mxu0
        %v822 = vadd.f32 0.0, %v821
        %823 = vdwg.mxu0
        %v824 = vadd.f32 %v740, %v762
        %v825 = vadd.f32 %v741, %v782
        %v826 = vadd.f32 %v742, %v802
        %v827 = vadd.f32 %v743, %v822
        %v828 = vxor.u32 %v824, 2147483648
        %v829 = vmul.f32 %v828, 1.442695
        %v830 = vpow.pop %v829
        %v831 = vadd.f32 %v830, 1.0
        %v832 = vrcp.pop %v831
        %v833 = vmul.f32 %v831, %v832
        %v834 = vsub.f32 1.0, %v833
        %v835 = vmul.f32 %v832, %v834
        %v836 = vadd.f32 %v832, %v835
        %vm837 = vweird.f32 %v831
        %vm838 = vweird.f32 %v832
        %vm839 = vmor %vm837, %vm838
        %v840 = vsel %vm839, %v832, %v836
        %v841 = vand.u32 2147483647, %v831
        %vm842 = vcmp.eq.f32.partialorder %v841, 8.507059e+37
        %v843 = vand.u32 %v831, 2147483648
        %v844 = vor.u32 1.1754944e-38, %v843
        %v845 = vsel %vm842, %v844, %v840
        %v846 = vmul.f32 1.0, %v845
        %v847 = vxor.u32 %v825, 2147483648
        %v848 = vmul.f32 %v847, 1.442695
        %v849 = vpow.pop %v848
        %v850 = vadd.f32 %v849, 1.0
        %v851 = vrcp.pop %v850
        %v852 = vmul.f32 %v850, %v851
        %v853 = vsub.f32 1.0, %v852
        %v854 = vmul.f32 %v851, %v853
        %v855 = vadd.f32 %v851, %v854
        %vm856 = vweird.f32 %v850
        %vm857 = vweird.f32 %v851
        %vm858 = vmor %vm856, %vm857
        %v859 = vsel %vm858, %v851, %v855
        %v860 = vand.u32 2147483647, %v850
        %vm861 = vcmp.eq.f32.partialorder %v860, 8.507059e+37
        %v862 = vand.u32 %v850, 2147483648
        %v863 = vor.u32 1.1754944e-38, %v862
        %v864 = vsel %vm861, %v863, %v859
        %v865 = vmul.f32 1.0, %v864
        %v866 = vtanh.pop %v826
        %v867 = vxor.u32 %v827, 2147483648
        %v868 = vmul.f32 %v867, 1.442695
        %v869 = vpow.pop %v868
        %v870 = vadd.f32 %v869, 1.0
        %v871 = vrcp.pop %v870
        %v872 = vmul.f32 %v870, %v871
        %v873 = vsub.f32 1.0, %v872
        %v874 = vmul.f32 %v871, %v873
        %v875 = vadd.f32 %v871, %v874
        %vm876 = vweird.f32 %v870
        %vm877 = vweird.f32 %v871
        %vm878 = vmor %vm876, %vm877
        %v879 = vsel %vm878, %v871, %v875
        %v880 = vand.u32 2147483647, %v870
        %vm881 = vcmp.eq.f32.partialorder %v880, 8.507059e+37
        %v882 = vand.u32 %v870, 2147483648
        %v883 = vor.u32 1.1754944e-38, %v882
        %v884 = vsel %vm881, %v883, %v879
        %v885 = vmul.f32 1.0, %v884
        %v886 = vmul.f32 %v865, %v734
        %v887 = vmul.f32 %v846, %v866
        %v888 = vadd.f32 %v886, %v887
        %v889 = vtanh.pop %v888
        %v890 = vmul.f32 %v885, %v889
        %s891 = scalar_lea.vmem %s352, 16 [#allocation12]
        %892 = vst [vmem:[%s891] sm:$0xff] %v890
        %s893 = scalar_lea.vmem %s312, 96 [#allocation4]
        %v894 = vld [vmem:[%s893] sm:$0xff]
        %v895 = vld [vmem:[%s893 + $0x8] sm:$0xff]
        %v896 = vld [vmem:[%s893 + $0x10] sm:$0xff]
        %v897 = vld [vmem:[%s893 + $0x18] sm:$0xff]
        %898 = vmatpush.msra.mxu0 %v427
        %899 = vmatpush.msra.mxu0 %v423
        %900 = vmatpush.msra.mxu0 %v419
        %901 = vmatpush.msra.mxu0 %v415
        %902 = vmatpush.msra.mxu0 %v411
        %903 = vmatpush.msra.mxu0 %v407
        %904 = vmatpush.msra.mxu0 %v403
        %905 = vmatpush.msra.mxu0 %v399
        %906 = vmatpush.msra.mxu0 %v395
        %907 = vmatpush.msra.mxu0 %v391
        %908 = vmatpush.msra.mxu0 %v387
        %909 = vmatpush.msra.mxu0 %v383
        %910 = vmatpush.msra.mxu0 %v379
        %911 = vmatpush.msra.mxu0 %v375
        %912 = vmatpush.msra.mxu0 %v371
        %913 = vmatpush.msra.mxu0 %v367
        %914 = vmatmul.f32.gmra.mxu0 %v890
        %v915 = vpop.f32.mrf.mxu0
        %v916 = vadd.f32 0.0, %v915
        %917 = vdwg.mxu0
        %918 = vmatpush.msra.mxu0 %v428
        %919 = vmatpush.msra.mxu0 %v424
        %920 = vmatpush.msra.mxu0 %v420
        %921 = vmatpush.msra.mxu0 %v416
        %922 = vmatpush.msra.mxu0 %v412
        %923 = vmatpush.msra.mxu0 %v408
        %924 = vmatpush.msra.mxu0 %v404
        %925 = vmatpush.msra.mxu0 %v400
        %926 = vmatpush.msra.mxu0 %v396
        %927 = vmatpush.msra.mxu0 %v392
        %928 = vmatpush.msra.mxu0 %v388
        %929 = vmatpush.msra.mxu0 %v384
        %930 = vmatpush.msra.mxu0 %v380
        %931 = vmatpush.msra.mxu0 %v376
        %932 = vmatpush.msra.mxu0 %v372
        %933 = vmatpush.msra.mxu0 %v368
        %934 = vmatmul.f32.gmra.mxu0 %v890
        %v935 = vpop.f32.mrf.mxu0
        %v936 = vadd.f32 0.0, %v935
        %937 = vdwg.mxu0
        %938 = vmatpush.msra.mxu0 %v429
        %939 = vmatpush.msra.mxu0 %v425
        %940 = vmatpush.msra.mxu0 %v421
        %941 = vmatpush.msra.mxu0 %v417
        %942 = vmatpush.msra.mxu0 %v413
        %943 = vmatpush.msra.mxu0 %v409
        %944 = vmatpush.msra.mxu0 %v405
        %945 = vmatpush.msra.mxu0 %v401
        %946 = vmatpush.msra.mxu0 %v397
        %947 = vmatpush.msra.mxu0 %v393
        %948 = vmatpush.msra.mxu0 %v389
        %949 = vmatpush.msra.mxu0 %v385
        %950 = vmatpush.msra.mxu0 %v381
        %951 = vmatpush.msra.mxu0 %v377
        %952 = vmatpush.msra.mxu0 %v373
        %953 = vmatpush.msra.mxu0 %v369
        %954 = vmatmul.f32.gmra.mxu0 %v890
        %v955 = vpop.f32.mrf.mxu0
        %v956 = vadd.f32 0.0, %v955
        %957 = vdwg.mxu0
        %958 = vmatpush.msra.mxu0 %v430
        %959 = vmatpush.msra.mxu0 %v426
        %960 = vmatpush.msra.mxu0 %v422
        %961 = vmatpush.msra.mxu0 %v418
        %962 = vmatpush.msra.mxu0 %v414
        %963 = vmatpush.msra.mxu0 %v410
        %964 = vmatpush.msra.mxu0 %v406
        %965 = vmatpush.msra.mxu0 %v402
        %966 = vmatpush.msra.mxu0 %v398
        %967 = vmatpush.msra.mxu0 %v394
        %968 = vmatpush.msra.mxu0 %v390
        %969 = vmatpush.msra.mxu0 %v386
        %970 = vmatpush.msra.mxu0 %v382
        %971 = vmatpush.msra.mxu0 %v378
        %972 = vmatpush.msra.mxu0 %v374
        %973 = vmatpush.msra.mxu0 %v370
        %974 = vmatmul.f32.gmra.mxu0 %v890
        %v975 = vpop.f32.mrf.mxu0
        %v976 = vadd.f32 0.0, %v975
        %977 = vdwg.mxu0
        %v978 = vadd.f32 %v894, %v916
        %v979 = vadd.f32 %v895, %v936
        %v980 = vadd.f32 %v896, %v956
        %v981 = vadd.f32 %v897, %v976
        %v982 = vxor.u32 %v978, 2147483648
        %v983 = vmul.f32 %v982, 1.442695
        %v984 = vpow.pop %v983
        %v985 = vadd.f32 %v984, 1.0
        %v986 = vrcp.pop %v985
        %v987 = vmul.f32 %v985, %v986
        %v988 = vsub.f32 1.0, %v987
        %v989 = vmul.f32 %v986, %v988
        %v990 = vadd.f32 %v986, %v989
        %vm991 = vweird.f32 %v985
        %vm992 = vweird.f32 %v986
        %vm993 = vmor %vm991, %vm992
        %v994 = vsel %vm993, %v986, %v990
        %v995 = vand.u32 2147483647, %v985
        %vm996 = vcmp.eq.f32.partialorder %v995, 8.507059e+37
        %v997 = vand.u32 %v985, 2147483648
        %v998 = vor.u32 1.1754944e-38, %v997
        %v999 = vsel %vm996, %v998, %v994
        %v1000 = vmul.f32 1.0, %v999
        %v1001 = vxor.u32 %v979, 2147483648
        %v1002 = vmul.f32 %v1001, 1.442695
        %v1003 = vpow.pop %v1002
        %v1004 = vadd.f32 %v1003, 1.0
        %v1005 = vrcp.pop %v1004
        %v1006 = vmul.f32 %v1004, %v1005
        %v1007 = vsub.f32 1.0, %v1006
        %v1008 = vmul.f32 %v1005, %v1007
        %v1009 = vadd.f32 %v1005, %v1008
        %vm1010 = vweird.f32 %v1004
        %vm1011 = vweird.f32 %v1005
        %vm1012 = vmor %vm1010, %vm1011
        %v1013 = vsel %vm1012, %v1005, %v1009
        %v1014 = vand.u32 2147483647, %v1004
        %vm1015 = vcmp.eq.f32.partialorder %v1014, 8.507059e+37
        %v1016 = vand.u32 %v1004, 2147483648
        %v1017 = vor.u32 1.1754944e-38, %v1016
        %v1018 = vsel %vm1015, %v1017, %v1013
        %v1019 = vmul.f32 1.0, %v1018
        %v1020 = vtanh.pop %v980
        %v1021 = vxor.u32 %v981, 2147483648
        %v1022 = vmul.f32 %v1021, 1.442695
        %v1023 = vpow.pop %v1022
        %v1024 = vadd.f32 %v1023, 1.0
        %v1025 = vrcp.pop %v1024
        %v1026 = vmul.f32 %v1024, %v1025
        %v1027 = vsub.f32 1.0, %v1026
        %v1028 = vmul.f32 %v1025, %v1027
        %v1029 = vadd.f32 %v1025, %v1028
        %vm1030 = vweird.f32 %v1024
        %vm1031 = vweird.f32 %v1025
        %vm1032 = vmor %vm1030, %vm1031
        %v1033 = vsel %vm1032, %v1025, %v1029
        %v1034 = vand.u32 2147483647, %v1024
        %vm1035 = vcmp.eq.f32.partialorder %v1034, 8.507059e+37
        %v1036 = vand.u32 %v1024, 2147483648
        %v1037 = vor.u32 1.1754944e-38, %v1036
        %v1038 = vsel %vm1035, %v1037, %v1033
        %v1039 = vmul.f32 1.0, %v1038
        %v1040 = vmul.f32 %v1019, %v888
        %v1041 = vmul.f32 %v1000, %v1020
        %v1042 = vadd.f32 %v1040, %v1041
        %v1043 = vtanh.pop %v1042
        %v1044 = vmul.f32 %v1039, %v1043
        %s1045 = scalar_lea.vmem %s352, 24 [#allocation12]
        %1046 = vst [vmem:[%s1045] sm:$0xff] %v1044
        %1047 = vst [vmem:[#allocation2] sm:$0xff] %v1044
        %1048 = vst [vmem:[#allocation3] sm:$0xff] %v1042
        %p1049 = scmp.eq.s32.totalorder %s32, 1
        // Predicated region
        $region57: #{tpu_custom_call.1} parent=35 // pred_check
          %p1050 = pneg %p1049
        $region58: #{tpu_custom_call.1} parent=35 // pred_check_branch
          %1052 = sbr.rel (%p1050) target = $region60
        $region59: #{tpu_custom_call.1} parent=35 // pred_region
          %1053 = vst [vmem:[#allocation13] sm:$0xff] %v1044
          %1054 = vst [vmem:[#allocation15] sm:$0xff] %v1042
        $region60: #{tpu_custom_call.1} parent=35 // pred_fallthru
          _
        %s1055 = sand.u32 %s150, 1
        %s1056 = scalar_lea.sflag [#allocation6], %s1055
        %s1057 = sand.u32 %s150, 1
        %s1058 = smul.addr %s1057, 32
        %s1059 = scalar_lea.vmem [#allocation12], %s1058
        // Predicated region
        $region61: #{tpu_custom_call.1} parent=35 // pred_check
          %p1060 = pneg %p160
        $region62: #{tpu_custom_call.1} parent=35 // pred_check_branch
          %1062 = sbr.rel (%p1060) target = $region64
        $region63: #{tpu_custom_call.1} parent=35 // pred_region
          %s1063 = smul.u32 4, %s32
          %1065 = vsyncadd %s1056, 0
          %s1066 = sadd.s32 %s31, %s1063
          %s1067 = smul.addr %s1066, 8
          %s1068 = scalar_lea.hbm %s4, %s1067
          %s1069 = sshll.u32 %s1059, 4
          %s1070 = int_to_ptr.vmem [resolvable:$true] %s1069
          %s1071 = sshll.u32 %s1068, 4
          %s1072 = int_to_ptr.hbm [resolvable:$true] %s1071
          %1077 = dma.vmem_to_hbm [thread:$0]  %s1070, 512, %s1072, %s1056, 128, 128, 8
        $region64: #{tpu_custom_call.1} parent=35 // pred_fallthru
          _
        // Predicated region
        $region65: #{tpu_custom_call.1} parent=35 // pred_check
          %p1078 = pneg %p186
        $region66: #{tpu_custom_call.1} parent=35 // pred_check_branch
          %1080 = sbr.rel (%p1078) target = $region68
        $region67: #{tpu_custom_call.1} parent=35 // pred_region
          %1082 = vsyncadd [#allocation14], 0
          %s1083 = smul.addr %s31, 8
          %s1084 = scalar_lea.hbm %s5, %s1083
          %s1086 = sshll.u32 [#allocation13], 4
          %s1087 = int_to_ptr.vmem [resolvable:$true] %s1086
          %s1088 = sshll.u32 %s1084, 4
          %s1089 = int_to_ptr.hbm [resolvable:$true] %s1088
          %1091 = dma.vmem_to_hbm [thread:$0]  %s1087, 128, %s1089, [#allocation14]
        $region68: #{tpu_custom_call.1} parent=35 // pred_fallthru
          _
        // Predicated region
        $region69: #{tpu_custom_call.1} parent=35 // pred_check
          %p1092 = pneg %p212
        $region70: #{tpu_custom_call.1} parent=35 // pred_check_branch
          %1094 = sbr.rel (%p1092) target = $region72
        $region71: #{tpu_custom_call.1} parent=35 // pred_region
          %1096 = vsyncadd [#allocation14], 0
          %s1097 = smul.addr %s31, 8
          %s1098 = scalar_lea.hbm %s6, %s1097
          %s1100 = sshll.u32 [#allocation15], 4
          %s1101 = int_to_ptr.vmem [resolvable:$true] %s1100
          %s1102 = sshll.u32 %s1098, 4
          %s1103 = int_to_ptr.hbm [resolvable:$true] %s1102
          %1105 = dma.vmem_to_hbm [thread:$0]  %s1101, 128, %s1103, [#allocation14]
        $region72: #{tpu_custom_call.1} parent=35 // pred_fallthru
          _
        // Predicated region
        $region73: #{tpu_custom_call.1} parent=35 // pred_check
          %p1106 = pneg %p186
        $region74: #{tpu_custom_call.1} parent=35 // pred_check_branch
          %1108 = sbr.rel (%p1106) target = $region76
        $region75: #{tpu_custom_call.1} parent=35 // pred_region
          %1110 = dma.done [#allocation14], 128
        $region76: #{tpu_custom_call.1} parent=35 // pred_fallthru
          _
        // Predicated region
        $region77: #{tpu_custom_call.1} parent=35 // pred_check
          %p1111 = pneg %p212
        $region78: #{tpu_custom_call.1} parent=35 // pred_check_branch
          %1113 = sbr.rel (%p1111) target = $region80
        $region79: #{tpu_custom_call.1} parent=35 // pred_region
          %1115 = dma.done [#allocation14], 128
        $region80: #{tpu_custom_call.1} parent=35 // pred_fallthru
          _
      $region36: #{tpu_custom_call.1} parent=5 // pred_fallthru
        _
      %p1116 = scmp.le.s32.totalorder 2, %s22
      // Predicated region
      $region81: #{tpu_custom_call.1} parent=5 // pred_check
        %p1117 = pneg %p1116
      $region82: #{tpu_custom_call.1} parent=5 // pred_check_branch
        %1119 = sbr.rel (%p1117) target = $region84
      $region83: #{tpu_custom_call.1} parent=5 // pred_region
        %s1120 = ssub.s32 %s22, 2
        // Predicated region
        $region85: #{tpu_custom_call.1} parent=83 // pred_check
          %p1121 = pneg %p166
        $region86: #{tpu_custom_call.1} parent=83 // pred_check_branch
          %1123 = sbr.rel (%p1121) target = $region88
        $region87: #{tpu_custom_call.1} parent=83 // pred_region
          %s1124 = sand.u32 %s151, 1
          %s1125 = scalar_lea.sflag [#allocation6], %s1124
          %s1126 = sand.u32 %s151, 1
          %s1127 = smul.addr %s1126, 32
          %s1128 = scalar_lea.vmem [#allocation12], %s1127
          %1130 = dma.done %s1125, 512
        $region88: #{tpu_custom_call.1} parent=83 // pred_fallthru
          _
      $region84: #{tpu_custom_call.1} parent=5 // pred_fallthru
        _
    $region6: #{tpu_custom_call.1} parent=1 // loop_footer
      %s26 = sadd.s32 1, %s22
    $region7: #{tpu_custom_call.1} parent=1 // loop_footer_branch
      %21 = sbr.rel target = $region3
    $region8: #{tpu_custom_call.1} parent=1 // loop_exit
      _
    %1131 = vsyncpa [#allocation5], 1
    %s1132 = scalar_lea.sflag [#allocation5], 1
    %1133 = vsyncpa %s1132, 1
    %1134 = vsyncpa [#allocation8], 1
    %1135 = vsyncpa [#allocation11], 1
    %1136 = vsyncpa [#allocation6], 1
    %s1137 = scalar_lea.sflag [#allocation6], 1
    %1138 = vsyncpa %s1137, 1
    %1139 = vsyncpa [#allocation14], 1

</llo_original>
